<compile_context>
chip_gen: v6e
topology: v6e:2x2x1
jax: 0.10.0
libtpu: 0.0.40
codegen_flags: <defaults>
</compile_context>

<pallas_src>
import functools

import jax
import jax.numpy as jnp
from jax import lax
from jax.experimental import pallas as pl
from jax.experimental.pallas import tpu as pltpu


def _round_up(x, m):
    return (x + m - 1) // m * m


def _gelu(x):
    # TODO(synk): PyTorch nn.GELU defaults to the exact erf form; we use the tanh
    # approximation for Mosaic-safe lowering (max abs diff ~1e-3).
    c = jnp.asarray(0.7978845608028654, x.dtype)  # sqrt(2/pi)
    return 0.5 * x * (1.0 + jnp.tanh(c * (x + 0.044715 * x * x * x)))


def predictor_kernel(x_ref, w3_ref, b3_ref, lnw_ref, lnb_ref,
                     w1_ref, b1_ref, wa_ref, ba_ref, wc_ref, bc_ref,
                     bbox_ref, cls_ref, *, wp, num_box, use_attention, eps):
    """One (batch, row-tile) step; channels-first, spatial flattened on lanes.

    x_ref   : [1, 1, Cin, (T+3)*Wp]  zero-padded input rows (3-row halo), flattened
    bbox_ref: [1, A4, T*Wp]          cls_ref: [1, CK, T*Wp]   (lane-dense tiles)
    """
    L = bbox_ref.shape[-1]                        # T * Wp  (multiple of 128)
    x = x_ref[0, 0]                               # [Cin, (T+3)*Wp]

    # --- enlarger: 3x3 conv (padding=1) as 9 accumulating shifted matmuls ---
    feat = jnp.dot(w3_ref[0], x[:, 0:L], preferred_element_type=jnp.float32)
    for k in range(1, 9):
        dy, dx = divmod(k, 3)
        off = dy * wp + dx                        # static lane offset per tap
        feat = feat + jnp.dot(w3_ref[k], x[:, off:off + L],
                              preferred_element_type=jnp.float32)
    feat = feat + b3_ref[...]

    # --- LayerNorm over channels (channels_first, eps=1e-6) ---
    mu = jnp.mean(feat, axis=0, keepdims=True)
    var = jnp.mean(jnp.square(feat - mu), axis=0, keepdims=True)
    feat = (feat - mu) * lax.rsqrt(var + eps)     # rsqrt -> EUP
    feat = feat * lnw_ref[...] + lnb_ref[...]

    # --- activation (GELU, style=True) ---
    feat = _gelu(feat)

    # --- bbox head + fused (W_q o W_b) query, packed into a single matmul ---
    out1 = jnp.dot(w1_ref[...], feat,
                   preferred_element_type=jnp.float32) + b1_ref[...]
    bbox = out1[:num_box]
    bbox_ref[0] = bbox.astype(bbox_ref.dtype)

    # --- additive attention (queries = bbox preds, keys = values = feat) ---
    if use_attention:
        q = out1[num_box:]                        # == W_q(bbox), fused through W_b
        scores = q * feat
        weight = pl.reciprocal(1.0 + jnp.exp(-scores), approx=True)  # sigmoid (EUP)
        att = weight * feat
        att = jnp.dot(wa_ref[...], att,
                      preferred_element_type=jnp.float32) + ba_ref[...]
        feat = _gelu(att)                         # Attention.ac

    # --- class head ---
    cls = jnp.dot(wc_ref[...], feat,
                  preferred_element_type=jnp.float32) + bc_ref[...]
    cls_ref[0] = cls.astype(cls_ref.dtype)


def predictor_forward(x_nchw, params, *, num_priors, num_classes,
                      attention=True, tile_rows=None):
    N, Cin, H, W = x_nchw.shape
    C2 = 2 * Cin
    A4 = num_priors * 4
    CK = num_priors * (num_classes + 1)

    # --- geometry: pad W to Wp (>= W+2, multiple of 16) and tile H by T rows so
    #     every kernel tile is [C, T*Wp] with T*Wp % 128 == 0 (lane-dense). ---
    Wp = _round_up(W + 2, 16)
    if tile_rows is None:
        tile_rows = max(8, (2048 // Wp) // 8 * 8)     # target ~2K lanes per tile
    T = max(8, (tile_rows // 8) * 8)
    T = min(T, _round_up(H, 8))
    Hp = _round_up(H, T)
    S = Hp // T                                       # number of row tiles
    L = T * Wp
    Lslab = (T + 3) * Wp                              # tile rows + 3-row halo

    # --- glue: zero-pad (1 top/left for the conv, extra right/bottom to reach
    #     Wp / Hp+3) and pre-extract per-tile row slabs, spatially flattened.
    xpad = jnp.pad(x_nchw, ((0, 0), (0, 0), (1, Hp + 2 - H), (1, Wp - 1 - W)))
    slabs = jnp.stack(
        [xpad[:, :, s * T:s * T + T + 3, :].reshape(N, Cin, Lslab)
         for s in range(S)], axis=1)                  # [N, S, Cin, Lslab]

    # --- glue: weights in channels-first matrix form; fuse W_q through W_b and
    #     pack it with the bbox head into one matmul.
    w3t = jnp.transpose(params["w3"], (2, 3, 0, 1)).reshape(9, C2, Cin)
    wb, wq = params["wb"], params["wq"]
    w1 = jnp.concatenate([wb, wq @ wb], axis=0)                        # [A4+C2, C2]
    b1 = jnp.concatenate([params["bb"],
                          wq @ params["bb"] + params["bq"]])[:, None]  # [A4+C2, 1]

    args = (slabs, w3t, params["b3"][:, None],
            params["ln_w"][:, None], params["ln_b"][:, None],
            w1, b1,
            params["wa"], params["ba"][:, None],
            params["wc"], params["bc"][:, None])

    def const_spec(a):
        nd = a.ndim
        return pl.BlockSpec(a.shape, lambda n, s, _nd=nd: (0,) * _nd)

    in_specs = ([pl.BlockSpec((1, 1, Cin, Lslab), lambda n, s: (n, s, 0, 0))]
                + [const_spec(a) for a in args[1:]])
    out_specs = [pl.BlockSpec((1, A4, L), lambda n, s: (n, 0, s)),
                 pl.BlockSpec((1, CK, L), lambda n, s: (n, 0, s))]
    out_shape = (jax.ShapeDtypeStruct((N, A4, Hp * Wp), x_nchw.dtype),
                 jax.ShapeDtypeStruct((N, CK, Hp * Wp), x_nchw.dtype))

    # explicit scoped-VMEM budget (tiny tiles; cap keeps v7x's 64 MiB VMEM safe)
    step_bytes = 4 * (2 * (Cin * Lslab + (A4 + CK) * L)
                      + sum(int(a.size) for a in args[1:]))
    vmem_limit = int(max(16 * 2 ** 20, min(64 * 2 ** 20, 8 * step_bytes)))

    kern = functools.partial(predictor_kernel, wp=Wp, num_box=A4,
                             use_attention=attention, eps=1e-6)
    bbox_flat, cls_flat = pl.pallas_call(
        kern,
        out_shape=out_shape,
        grid_spec=pltpu.PrefetchScalarGridSpec(
            num_scalar_prefetch=0,
            grid=(N, S),
            in_specs=in_specs,
            out_specs=out_specs),
        compiler_params=pltpu.CompilerParams(
            dimension_semantics=("parallel", "parallel"),
            vmem_limit_bytes=vmem_limit),
    )(*args)

    # outputs are already channels-first (NCHW): just un-pad the spatial axes.
    bbox = bbox_flat.reshape(N, A4, Hp, Wp)[:, :, :H, :W]
    cls = cls_flat.reshape(N, CK, Hp, Wp)[:, :, :H, :W]
    return bbox, cls


def init_params(key, input_channels, num_priors, num_classes):
    """Parameters in PyTorch conv layouts (OIHW 3x3, [out,in] 1x1, 1-D biases)."""
    Cin = input_channels
    C2 = 2 * Cin
    A4 = num_priors * 4
    CK = num_priors * (num_classes + 1)
    ks = jax.random.split(key, 5)

    def w(k, shape, fan_in):
        return jax.random.normal(k, shape, jnp.float32) / jnp.sqrt(float(fan_in))

    return {
        # enlarger: Conv2d(Cin, 2*Cin, k=3, padding=1)
        "w3": w(ks[0], (C2, Cin, 3, 3), 9 * Cin),
        "b3": jnp.full((C2,), 0.01, jnp.float32),
        # LayerNorm(channels_first, eps=1e-6)
        "ln_w": jnp.ones((C2,), jnp.float32),
        "ln_b": jnp.zeros((C2,), jnp.float32),
        # bbox_predictor: Conv2d(C2, num_priors*4, k=1)
        "wb": w(ks[1], (A4, C2), C2),
        "bb": jnp.full((A4,), 0.02, jnp.float32),
        # Attention.W_q: Conv2d(num_priors*4, C2, k=1)
        "wq": w(ks[2], (C2, A4), A4),
        "bq": jnp.zeros((C2,), jnp.float32),
        # Attention.W_a: Conv2d(C2, C2, k=1)
        "wa": w(ks[3], (C2, C2), C2),
        "ba": jnp.zeros((C2,), jnp.float32),
        # class_predictor: Conv2d(C2, num_priors*(num_classes+1), k=1)
        "wc": w(ks[4], (CK, C2), C2),
        "bc": jnp.zeros((CK,), jnp.float32),
    }


def predictor_reference(x, params, *, attention=True):
    """Plain-JAX (XLA) reference of Predictor.forward, for sanity checking."""
    feat = lax.conv_general_dilated(
        x, params["w3"], window_strides=(1, 1), padding=((1, 1), (1, 1)),
        dimension_numbers=("NCHW", "OIHW", "NCHW"))
    feat = feat + params["b3"][None, :, None, None]
    mu = jnp.mean(feat, axis=1, keepdims=True)
    var = jnp.mean(jnp.square(feat - mu), axis=1, keepdims=True)
    feat = (feat - mu) / jnp.sqrt(var + 1e-6)
    feat = feat * params["ln_w"][None, :, None, None] + params["ln_b"][None, :, None, None]
    feat = _gelu(feat)

    def conv1x1(t, w, b):
        return jnp.einsum("oc,nchw->nohw", w, t) + b[None, :, None, None]

    bbox = conv1x1(feat, params["wb"], params["bb"])
    if attention:
        q = conv1x1(bbox, params["wq"], params["bq"])
        weight = jax.nn.sigmoid(q * feat)
        att = conv1x1(weight * feat, params["wa"], params["ba"])
        feat = _gelu(att)
    cls = conv1x1(feat, params["wc"], params["bc"])
    return bbox, cls


if __name__ == "__main__":
    key = jax.random.PRNGKey(0)
    k_x, k_p = jax.random.split(key)

    # small shapes consistent with the module
    N, Cin, H, W = 2, 4, 16, 16
    num_priors, num_classes = 4, 3

    x = jax.random.normal(k_x, (N, Cin, H, W), jnp.float32)
    params = init_params(k_p, Cin, num_priors, num_classes)

    # tile_rows=8 -> 2 spatial tiles per image (exercises the (batch, tile) grid)
    bbox_preds, classes_preds = predictor_forward(
        x, params, num_priors=num_priors, num_classes=num_classes,
        attention=True, tile_rows=8)
    jax.block_until_ready((bbox_preds, classes_preds))

    assert bbox_preds.shape == (N, num_priors * 4, H, W)
    assert classes_preds.shape == (N, num_priors * (num_classes + 1), H, W)

    # numerical sanity check against a plain-JAX reference of the same forward
    bbox_want, cls_want = predictor_reference(x, params, attention=True)
    err_b = float(jnp.max(jnp.abs(bbox_preds - bbox_want)))
    err_c = float(jnp.max(jnp.abs(classes_preds - cls_want)))
    assert err_b < 1e-1 and err_c < 1e-1, (err_b, err_c)

    print("KERNEL_OK")
</pallas_src>

<mosaic_0001>
module attributes {stable_mosaic.version = 11 : i64} {
  func.func @predictor_kernel(%arg0: i32, %arg1: i32, %arg2: memref<1x1x4x352xf32, #tpu.memory_space<vmem>>, %arg3: memref<9x8x4xf32, #tpu.memory_space<vmem>>, %arg4: memref<8x1xf32, #tpu.memory_space<vmem>>, %arg5: memref<8x1xf32, #tpu.memory_space<vmem>>, %arg6: memref<8x1xf32, #tpu.memory_space<vmem>>, %arg7: memref<24x8xf32, #tpu.memory_space<vmem>>, %arg8: memref<24x1xf32, #tpu.memory_space<vmem>>, %arg9: memref<8x8xf32, #tpu.memory_space<vmem>>, %arg10: memref<8x1xf32, #tpu.memory_space<vmem>>, %arg11: memref<16x8xf32, #tpu.memory_space<vmem>>, %arg12: memref<16x1xf32, #tpu.memory_space<vmem>>, %arg13: memref<1x16x256xf32, #tpu.memory_space<vmem>>, %arg14: memref<1x16x256xf32, #tpu.memory_space<vmem>>) attributes {dimension_semantics = [#tpu.dimension_semantics<parallel>, #tpu.dimension_semantics<parallel>], iteration_bounds = array<i64: 2, 2>, scalar_prefetch = 0 : i64, scratch_operands = 0 : i64, tpu.core_type = #tpu.core_type<tc>, window_params = [{transform_indices = @transform_0, window_bounds = array<i64: 1, 1, 4, 352>}, {pipeline_mode = #tpu.pipeline_mode<synchronous>, transform_indices = @transform_1, window_bounds = array<i64: 9, 8, 4>}, {pipeline_mode = #tpu.pipeline_mode<synchronous>, transform_indices = @transform_2, window_bounds = array<i64: 8, 1>}, {pipeline_mode = #tpu.pipeline_mode<synchronous>, transform_indices = @transform_3, window_bounds = array<i64: 8, 1>}, {pipeline_mode = #tpu.pipeline_mode<synchronous>, transform_indices = @transform_4, window_bounds = array<i64: 8, 1>}, {pipeline_mode = #tpu.pipeline_mode<synchronous>, transform_indices = @transform_5, window_bounds = array<i64: 24, 8>}, {pipeline_mode = #tpu.pipeline_mode<synchronous>, transform_indices = @transform_6, window_bounds = array<i64: 24, 1>}, {pipeline_mode = #tpu.pipeline_mode<synchronous>, transform_indices = @transform_7, window_bounds = array<i64: 8, 8>}, {pipeline_mode = #tpu.pipeline_mode<synchronous>, transform_indices = @transform_8, window_bounds = array<i64: 8, 1>}, {pipeline_mode = #tpu.pipeline_mode<synchronous>, transform_indices = @transform_9, window_bounds = array<i64: 16, 8>}, {pipeline_mode = #tpu.pipeline_mode<synchronous>, transform_indices = @transform_10, window_bounds = array<i64: 16, 1>}, {transform_indices = @transform_11, window_bounds = array<i64: 1, 16, 256>}, {transform_indices = @transform_12, window_bounds = array<i64: 1, 16, 256>}]} {
    %c0 = arith.constant 0 : index
    %c0_0 = arith.constant 0 : index
    %c0_1 = arith.constant 0 : index
    %c0_2 = arith.constant 0 : index
    %0 = vector.load %arg2[%c0, %c0_0, %c0_1, %c0_2] : memref<1x1x4x352xf32, #tpu.memory_space<vmem>>, vector<1x1x4x352xf32>
    %1 = vector.shape_cast %0 : vector<1x1x4x352xf32> to vector<4x352xf32>
    %c0_3 = arith.constant 0 : index
    %c0_4 = arith.constant 0 : index
    %c0_5 = arith.constant 0 : index
    %2 = vector.load %arg3[%c0_3, %c0_4, %c0_5] : memref<9x8x4xf32, #tpu.memory_space<vmem>>, vector<1x8x4xf32>
    %3 = vector.shape_cast %2 : vector<1x8x4xf32> to vector<8x4xf32>
    %4 = vector.extract_strided_slice %1 {offsets = [0, 0], sizes = [4, 256], strides = [1, 1]} : vector<4x352xf32> to vector<4x256xf32>
    %cst = arith.constant dense<0.000000e+00> : vector<8x256xf32>
    %5 = tpu.matmul %3, %4, %cst {dimension_numbers = #tpu.dot_dimension_numbers<[1], [0], [0], [1], [0, 0, 1, 1], [], []>} : vector<8x4xf32>, vector<4x256xf32>, vector<8x256xf32> -> vector<8x256xf32>
    %c1 = arith.constant 1 : index
    %c0_6 = arith.constant 0 : index
    %c0_7 = arith.constant 0 : index
    %6 = vector.load %arg3[%c1, %c0_6, %c0_7] : memref<9x8x4xf32, #tpu.memory_space<vmem>>, vector<1x8x4xf32>
    %7 = vector.shape_cast %6 : vector<1x8x4xf32> to vector<8x4xf32>
    %8 = vector.extract_strided_slice %1 {offsets = [0, 1], sizes = [4, 256], strides = [1, 1]} : vector<4x352xf32> to vector<4x256xf32>
    %cst_8 = arith.constant dense<0.000000e+00> : vector<8x256xf32>
    %9 = tpu.matmul %7, %8, %cst_8 {dimension_numbers = #tpu.dot_dimension_numbers<[1], [0], [0], [1], [0, 0, 1, 1], [], []>} : vector<8x4xf32>, vector<4x256xf32>, vector<8x256xf32> -> vector<8x256xf32>
    %10 = arith.addf %5, %9 : vector<8x256xf32>
    %c2 = arith.constant 2 : index
    %c0_9 = arith.constant 0 : index
    %c0_10 = arith.constant 0 : index
    %11 = vector.load %arg3[%c2, %c0_9, %c0_10] : memref<9x8x4xf32, #tpu.memory_space<vmem>>, vector<1x8x4xf32>
    %12 = vector.shape_cast %11 : vector<1x8x4xf32> to vector<8x4xf32>
    %13 = vector.extract_strided_slice %1 {offsets = [0, 2], sizes = [4, 256], strides = [1, 1]} : vector<4x352xf32> to vector<4x256xf32>
    %cst_11 = arith.constant dense<0.000000e+00> : vector<8x256xf32>
    %14 = tpu.matmul %12, %13, %cst_11 {dimension_numbers = #tpu.dot_dimension_numbers<[1], [0], [0], [1], [0, 0, 1, 1], [], []>} : vector<8x4xf32>, vector<4x256xf32>, vector<8x256xf32> -> vector<8x256xf32>
    %15 = arith.addf %10, %14 : vector<8x256xf32>
    %c3 = arith.constant 3 : index
    %c0_12 = arith.constant 0 : index
    %c0_13 = arith.constant 0 : index
    %16 = vector.load %arg3[%c3, %c0_12, %c0_13] : memref<9x8x4xf32, #tpu.memory_space<vmem>>, vector<1x8x4xf32>
    %17 = vector.shape_cast %16 : vector<1x8x4xf32> to vector<8x4xf32>
    %18 = vector.extract_strided_slice %1 {offsets = [0, 32], sizes = [4, 256], strides = [1, 1]} : vector<4x352xf32> to vector<4x256xf32>
    %cst_14 = arith.constant dense<0.000000e+00> : vector<8x256xf32>
    %19 = tpu.matmul %17, %18, %cst_14 {dimension_numbers = #tpu.dot_dimension_numbers<[1], [0], [0], [1], [0, 0, 1, 1], [], []>} : vector<8x4xf32>, vector<4x256xf32>, vector<8x256xf32> -> vector<8x256xf32>
    %20 = arith.addf %15, %19 : vector<8x256xf32>
    %c4 = arith.constant 4 : index
    %c0_15 = arith.constant 0 : index
    %c0_16 = arith.constant 0 : index
    %21 = vector.load %arg3[%c4, %c0_15, %c0_16] : memref<9x8x4xf32, #tpu.memory_space<vmem>>, vector<1x8x4xf32>
    %22 = vector.shape_cast %21 : vector<1x8x4xf32> to vector<8x4xf32>
    %23 = vector.extract_strided_slice %1 {offsets = [0, 33], sizes = [4, 256], strides = [1, 1]} : vector<4x352xf32> to vector<4x256xf32>
    %cst_17 = arith.constant dense<0.000000e+00> : vector<8x256xf32>
    %24 = tpu.matmul %22, %23, %cst_17 {dimension_numbers = #tpu.dot_dimension_numbers<[1], [0], [0], [1], [0, 0, 1, 1], [], []>} : vector<8x4xf32>, vector<4x256xf32>, vector<8x256xf32> -> vector<8x256xf32>
    %25 = arith.addf %20, %24 : vector<8x256xf32>
    %c5 = arith.constant 5 : index
    %c0_18 = arith.constant 0 : index
    %c0_19 = arith.constant 0 : index
    %26 = vector.load %arg3[%c5, %c0_18, %c0_19] : memref<9x8x4xf32, #tpu.memory_space<vmem>>, vector<1x8x4xf32>
    %27 = vector.shape_cast %26 : vector<1x8x4xf32> to vector<8x4xf32>
    %28 = vector.extract_strided_slice %1 {offsets = [0, 34], sizes = [4, 256], strides = [1, 1]} : vector<4x352xf32> to vector<4x256xf32>
    %cst_20 = arith.constant dense<0.000000e+00> : vector<8x256xf32>
    %29 = tpu.matmul %27, %28, %cst_20 {dimension_numbers = #tpu.dot_dimension_numbers<[1], [0], [0], [1], [0, 0, 1, 1], [], []>} : vector<8x4xf32>, vector<4x256xf32>, vector<8x256xf32> -> vector<8x256xf32>
    %30 = arith.addf %25, %29 : vector<8x256xf32>
    %c6 = arith.constant 6 : index
    %c0_21 = arith.constant 0 : index
    %c0_22 = arith.constant 0 : index
    %31 = vector.load %arg3[%c6, %c0_21, %c0_22] : memref<9x8x4xf32, #tpu.memory_space<vmem>>, vector<1x8x4xf32>
    %32 = vector.shape_cast %31 : vector<1x8x4xf32> to vector<8x4xf32>
    %33 = vector.extract_strided_slice %1 {offsets = [0, 64], sizes = [4, 256], strides = [1, 1]} : vector<4x352xf32> to vector<4x256xf32>
    %cst_23 = arith.constant dense<0.000000e+00> : vector<8x256xf32>
    %34 = tpu.matmul %32, %33, %cst_23 {dimension_numbers = #tpu.dot_dimension_numbers<[1], [0], [0], [1], [0, 0, 1, 1], [], []>} : vector<8x4xf32>, vector<4x256xf32>, vector<8x256xf32> -> vector<8x256xf32>
    %35 = arith.addf %30, %34 : vector<8x256xf32>
    %c7 = arith.constant 7 : index
    %c0_24 = arith.constant 0 : index
    %c0_25 = arith.constant 0 : index
    %36 = vector.load %arg3[%c7, %c0_24, %c0_25] : memref<9x8x4xf32, #tpu.memory_space<vmem>>, vector<1x8x4xf32>
    %37 = vector.shape_cast %36 : vector<1x8x4xf32> to vector<8x4xf32>
    %38 = vector.extract_strided_slice %1 {offsets = [0, 65], sizes = [4, 256], strides = [1, 1]} : vector<4x352xf32> to vector<4x256xf32>
    %cst_26 = arith.constant dense<0.000000e+00> : vector<8x256xf32>
    %39 = tpu.matmul %37, %38, %cst_26 {dimension_numbers = #tpu.dot_dimension_numbers<[1], [0], [0], [1], [0, 0, 1, 1], [], []>} : vector<8x4xf32>, vector<4x256xf32>, vector<8x256xf32> -> vector<8x256xf32>
    %40 = arith.addf %35, %39 : vector<8x256xf32>
    %c8 = arith.constant 8 : index
    %c0_27 = arith.constant 0 : index
    %c0_28 = arith.constant 0 : index
    %41 = vector.load %arg3[%c8, %c0_27, %c0_28] : memref<9x8x4xf32, #tpu.memory_space<vmem>>, vector<1x8x4xf32>
    %42 = vector.shape_cast %41 : vector<1x8x4xf32> to vector<8x4xf32>
    %43 = vector.extract_strided_slice %1 {offsets = [0, 66], sizes = [4, 256], strides = [1, 1]} : vector<4x352xf32> to vector<4x256xf32>
    %cst_29 = arith.constant dense<0.000000e+00> : vector<8x256xf32>
    %44 = tpu.matmul %42, %43, %cst_29 {dimension_numbers = #tpu.dot_dimension_numbers<[1], [0], [0], [1], [0, 0, 1, 1], [], []>} : vector<8x4xf32>, vector<4x256xf32>, vector<8x256xf32> -> vector<8x256xf32>
    %45 = arith.addf %40, %44 : vector<8x256xf32>
    %c0_30 = arith.constant 0 : index
    %c0_31 = arith.constant 0 : index
    %46 = vector.load %arg4[%c0_30, %c0_31] : memref<8x1xf32, #tpu.memory_space<vmem>>, vector<8x1xf32>
    %47 = vector.broadcast %46 : vector<8x1xf32> to vector<8x256xf32>
    %48 = arith.addf %45, %47 : vector<8x256xf32>
    %cst_32 = arith.constant dense<0.000000e+00> : vector<256xf32>
    %49 = vector.multi_reduction <add>, %48, %cst_32 [0] : vector<8x256xf32> to vector<256xf32>
    %50 = vector.shape_cast %49 : vector<256xf32> to vector<1x256xf32>
    %cst_33 = arith.constant 8.000000e+00 : f32
    %51 = vector.broadcast %cst_33 : f32 to vector<1x256xf32>
    %52 = arith.divf %50, %51 : vector<1x256xf32>
    %53 = vector.broadcast %52 : vector<1x256xf32> to vector<8x256xf32>
    %54 = arith.subf %48, %53 : vector<8x256xf32>
    %55 = arith.mulf %54, %54 : vector<8x256xf32>
    %cst_34 = arith.constant dense<0.000000e+00> : vector<256xf32>
    %56 = vector.multi_reduction <add>, %55, %cst_34 [0] : vector<8x256xf32> to vector<256xf32>
    %57 = vector.shape_cast %56 : vector<256xf32> to vector<1x256xf32>
    %cst_35 = arith.constant 8.000000e+00 : f32
    %58 = vector.broadcast %cst_35 : f32 to vector<1x256xf32>
    %59 = arith.divf %57, %58 : vector<1x256xf32>
    %60 = vector.broadcast %52 : vector<1x256xf32> to vector<8x256xf32>
    %61 = arith.subf %48, %60 : vector<8x256xf32>
    %cst_36 = arith.constant 9.99999997E-7 : f32
    %62 = vector.broadcast %cst_36 : f32 to vector<1x256xf32>
    %63 = arith.addf %59, %62 : vector<1x256xf32>
    %64 = math.rsqrt %63 : vector<1x256xf32>
    %65 = vector.broadcast %64 : vector<1x256xf32> to vector<8x256xf32>
    %66 = arith.mulf %61, %65 : vector<8x256xf32>
    %c0_37 = arith.constant 0 : index
    %c0_38 = arith.constant 0 : index
    %67 = vector.load %arg5[%c0_37, %c0_38] : memref<8x1xf32, #tpu.memory_space<vmem>>, vector<8x1xf32>
    %68 = vector.broadcast %67 : vector<8x1xf32> to vector<8x256xf32>
    %69 = arith.mulf %66, %68 : vector<8x256xf32>
    %c0_39 = arith.constant 0 : index
    %c0_40 = arith.constant 0 : index
    %70 = vector.load %arg6[%c0_39, %c0_40] : memref<8x1xf32, #tpu.memory_space<vmem>>, vector<8x1xf32>
    %71 = vector.broadcast %70 : vector<8x1xf32> to vector<8x256xf32>
    %72 = arith.addf %69, %71 : vector<8x256xf32>
    %cst_41 = arith.constant 5.000000e-01 : f32
    %73 = vector.broadcast %cst_41 : f32 to vector<8x256xf32>
    %74 = arith.mulf %73, %72 : vector<8x256xf32>
    %cst_42 = arith.constant 4.471500e-02 : f32
    %75 = vector.broadcast %cst_42 : f32 to vector<8x256xf32>
    %76 = arith.mulf %75, %72 : vector<8x256xf32>
    %77 = arith.mulf %76, %72 : vector<8x256xf32>
    %78 = arith.mulf %77, %72 : vector<8x256xf32>
    %79 = arith.addf %72, %78 : vector<8x256xf32>
    %cst_43 = arith.constant 0.797884583 : f32
    %80 = vector.broadcast %cst_43 : f32 to vector<8x256xf32>
    %81 = arith.mulf %80, %79 : vector<8x256xf32>
    %82 = math.tanh %81 : vector<8x256xf32>
    %cst_44 = arith.constant 1.000000e+00 : f32
    %83 = vector.broadcast %cst_44 : f32 to vector<8x256xf32>
    %84 = arith.addf %83, %82 : vector<8x256xf32>
    %85 = arith.mulf %74, %84 : vector<8x256xf32>
    %c0_45 = arith.constant 0 : index
    %c0_46 = arith.constant 0 : index
    %86 = vector.load %arg7[%c0_45, %c0_46] : memref<24x8xf32, #tpu.memory_space<vmem>>, vector<24x8xf32>
    %cst_47 = arith.constant dense<0.000000e+00> : vector<24x256xf32>
    %87 = tpu.matmul %86, %85, %cst_47 {dimension_numbers = #tpu.dot_dimension_numbers<[1], [0], [0], [1], [0, 0, 1, 1], [], []>} : vector<24x8xf32>, vector<8x256xf32>, vector<24x256xf32> -> vector<24x256xf32>
    %c0_48 = arith.constant 0 : index
    %c0_49 = arith.constant 0 : index
    %88 = vector.load %arg8[%c0_48, %c0_49] : memref<24x1xf32, #tpu.memory_space<vmem>>, vector<24x1xf32>
    %89 = vector.broadcast %88 : vector<24x1xf32> to vector<24x256xf32>
    %90 = arith.addf %87, %89 : vector<24x256xf32>
    %91 = vector.extract_strided_slice %90 {offsets = [0, 0], sizes = [16, 256], strides = [1, 1]} : vector<24x256xf32> to vector<16x256xf32>
    %c0_50 = arith.constant 0 : index
    %c0_51 = arith.constant 0 : index
    %c0_52 = arith.constant 0 : index
    %92 = vector.load %arg13[%c0_50, %c0_51, %c0_52] : memref<1x16x256xf32, #tpu.memory_space<vmem>>, vector<1x16x256xf32>
    %93 = vector.shape_cast %92 : vector<1x16x256xf32> to vector<16x256xf32>
    %94 = vector.shape_cast %91 : vector<16x256xf32> to vector<1x16x256xf32>
    tpu.vector_store %arg13[%c0_50, %c0_51, %c0_52], %94 {strides = array<i32>} : memref<1x16x256xf32, #tpu.memory_space<vmem>>, vector<1x16x256xf32>,
    %95 = vector.extract_strided_slice %90 {offsets = [16, 0], sizes = [8, 256], strides = [1, 1]} : vector<24x256xf32> to vector<8x256xf32>
    %96 = arith.mulf %95, %85 : vector<8x256xf32>
    %cst_53 = arith.constant 0.000000e+00 : f32
    %97 = vector.broadcast %cst_53 : f32 to vector<8x256xf32>
    %98 = arith.subf %97, %96 : vector<8x256xf32>
    %99 = math.exp %98 : vector<8x256xf32>
    %cst_54 = arith.constant 1.000000e+00 : f32
    %100 = vector.broadcast %cst_54 : f32 to vector<8x256xf32>
    %101 = arith.addf %100, %99 : vector<8x256xf32>
    %102 = tpu.reciprocal %101 {approx = true} : vector<8x256xf32> -> vector<8x256xf32>
    %103 = arith.mulf %102, %85 : vector<8x256xf32>
    %c0_55 = arith.constant 0 : index
    %c0_56 = arith.constant 0 : index
    %104 = vector.load %arg9[%c0_55, %c0_56] : memref<8x8xf32, #tpu.memory_space<vmem>>, vector<8x8xf32>
    %cst_57 = arith.constant dense<0.000000e+00> : vector<8x256xf32>
    %105 = tpu.matmul %104, %103, %cst_57 {dimension_numbers = #tpu.dot_dimension_numbers<[1], [0], [0], [1], [0, 0, 1, 1], [], []>} : vector<8x8xf32>, vector<8x256xf32>, vector<8x256xf32> -> vector<8x256xf32>
    %c0_58 = arith.constant 0 : index
    %c0_59 = arith.constant 0 : index
    %106 = vector.load %arg10[%c0_58, %c0_59] : memref<8x1xf32, #tpu.memory_space<vmem>>, vector<8x1xf32>
    %107 = vector.broadcast %106 : vector<8x1xf32> to vector<8x256xf32>
    %108 = arith.addf %105, %107 : vector<8x256xf32>
    %cst_60 = arith.constant 5.000000e-01 : f32
    %109 = vector.broadcast %cst_60 : f32 to vector<8x256xf32>
    %110 = arith.mulf %109, %108 : vector<8x256xf32>
    %cst_61 = arith.constant 4.471500e-02 : f32
    %111 = vector.broadcast %cst_61 : f32 to vector<8x256xf32>
    %112 = arith.mulf %111, %108 : vector<8x256xf32>
    %113 = arith.mulf %112, %108 : vector<8x256xf32>
    %114 = arith.mulf %113, %108 : vector<8x256xf32>
    %115 = arith.addf %108, %114 : vector<8x256xf32>
    %cst_62 = arith.constant 0.797884583 : f32
    %116 = vector.broadcast %cst_62 : f32 to vector<8x256xf32>
    %117 = arith.mulf %116, %115 : vector<8x256xf32>
    %118 = math.tanh %117 : vector<8x256xf32>
    %cst_63 = arith.constant 1.000000e+00 : f32
    %119 = vector.broadcast %cst_63 : f32 to vector<8x256xf32>
    %120 = arith.addf %119, %118 : vector<8x256xf32>
    %121 = arith.mulf %110, %120 : vector<8x256xf32>
    %c0_64 = arith.constant 0 : index
    %c0_65 = arith.constant 0 : index
    %122 = vector.load %arg11[%c0_64, %c0_65] : memref<16x8xf32, #tpu.memory_space<vmem>>, vector<16x8xf32>
    %cst_66 = arith.constant dense<0.000000e+00> : vector<16x256xf32>
    %123 = tpu.matmul %122, %121, %cst_66 {dimension_numbers = #tpu.dot_dimension_numbers<[1], [0], [0], [1], [0, 0, 1, 1], [], []>} : vector<16x8xf32>, vector<8x256xf32>, vector<16x256xf32> -> vector<16x256xf32>
    %c0_67 = arith.constant 0 : index
    %c0_68 = arith.constant 0 : index
    %124 = vector.load %arg12[%c0_67, %c0_68] : memref<16x1xf32, #tpu.memory_space<vmem>>, vector<16x1xf32>
    %125 = vector.broadcast %124 : vector<16x1xf32> to vector<16x256xf32>
    %126 = arith.addf %123, %125 : vector<16x256xf32>
    %c0_69 = arith.constant 0 : index
    %c0_70 = arith.constant 0 : index
    %c0_71 = arith.constant 0 : index
    %127 = vector.load %arg14[%c0_69, %c0_70, %c0_71] : memref<1x16x256xf32, #tpu.memory_space<vmem>>, vector<1x16x256xf32>
    %128 = vector.shape_cast %127 : vector<1x16x256xf32> to vector<16x256xf32>
    %129 = vector.shape_cast %126 : vector<16x256xf32> to vector<1x16x256xf32>
    tpu.vector_store %arg14[%c0_69, %c0_70, %c0_71], %129 {strides = array<i32>} : memref<1x16x256xf32, #tpu.memory_space<vmem>>, vector<1x16x256xf32>,
    return
  }
  func.func @transform_0(%arg0: i32, %arg1: i32) -> (i32, i32, i32, i32) {
    %c0_i32 = arith.constant 0 : i32
    %c0_i32_0 = arith.constant 0 : i32
    %c0_i32_1 = arith.constant 0 : i32
    return %arg0, %arg1, %c0_i32, %c0_i32_0 : i32, i32, i32, i32
  }
  func.func @transform_1(%arg0: i32, %arg1: i32) -> (i32, i32, i32) {
    %c0_i32 = arith.constant 0 : i32
    %c0_i32_0 = arith.constant 0 : i32
    %c0_i32_1 = arith.constant 0 : i32
    %c0_i32_2 = arith.constant 0 : i32
    return %c0_i32, %c0_i32_0, %c0_i32_1 : i32, i32, i32
  }
  func.func @transform_2(%arg0: i32, %arg1: i32) -> (i32, i32) {
    %c0_i32 = arith.constant 0 : i32
    %c0_i32_0 = arith.constant 0 : i32
    %c0_i32_1 = arith.constant 0 : i32
    return %c0_i32, %c0_i32_0 : i32, i32
  }
  func.func @transform_3(%arg0: i32, %arg1: i32) -> (i32, i32) {
    %c0_i32 = arith.constant 0 : i32
    %c0_i32_0 = arith.constant 0 : i32
    %c0_i32_1 = arith.constant 0 : i32
    return %c0_i32, %c0_i32_0 : i32, i32
  }
  func.func @transform_4(%arg0: i32, %arg1: i32) -> (i32, i32) {
    %c0_i32 = arith.constant 0 : i32
    %c0_i32_0 = arith.constant 0 : i32
    %c0_i32_1 = arith.constant 0 : i32
    return %c0_i32, %c0_i32_0 : i32, i32
  }
  func.func @transform_5(%arg0: i32, %arg1: i32) -> (i32, i32) {
    %c0_i32 = arith.constant 0 : i32
    %c0_i32_0 = arith.constant 0 : i32
    %c0_i32_1 = arith.constant 0 : i32
    return %c0_i32, %c0_i32_0 : i32, i32
  }
  func.func @transform_6(%arg0: i32, %arg1: i32) -> (i32, i32) {
    %c0_i32 = arith.constant 0 : i32
    %c0_i32_0 = arith.constant 0 : i32
    %c0_i32_1 = arith.constant 0 : i32
    return %c0_i32, %c0_i32_0 : i32, i32
  }
  func.func @transform_7(%arg0: i32, %arg1: i32) -> (i32, i32) {
    %c0_i32 = arith.constant 0 : i32
    %c0_i32_0 = arith.constant 0 : i32
    %c0_i32_1 = arith.constant 0 : i32
    return %c0_i32, %c0_i32_0 : i32, i32
  }
  func.func @transform_8(%arg0: i32, %arg1: i32) -> (i32, i32) {
    %c0_i32 = arith.constant 0 : i32
    %c0_i32_0 = arith.constant 0 : i32
    %c0_i32_1 = arith.constant 0 : i32
    return %c0_i32, %c0_i32_0 : i32, i32
  }
  func.func @transform_9(%arg0: i32, %arg1: i32) -> (i32, i32) {
    %c0_i32 = arith.constant 0 : i32
    %c0_i32_0 = arith.constant 0 : i32
    %c0_i32_1 = arith.constant 0 : i32
    return %c0_i32, %c0_i32_0 : i32, i32
  }
  func.func @transform_10(%arg0: i32, %arg1: i32) -> (i32, i32) {
    %c0_i32 = arith.constant 0 : i32
    %c0_i32_0 = arith.constant 0 : i32
    %c0_i32_1 = arith.constant 0 : i32
    return %c0_i32, %c0_i32_0 : i32, i32
  }
  func.func @transform_11(%arg0: i32, %arg1: i32) -> (i32, i32, i32) {
    %c0_i32 = arith.constant 0 : i32
    %c0_i32_0 = arith.constant 0 : i32
    return %arg0, %c0_i32, %arg1 : i32, i32, i32
  }
  func.func @transform_12(%arg0: i32, %arg1: i32) -> (i32, i32, i32) {
    %c0_i32 = arith.constant 0 : i32
    %c0_i32_0 = arith.constant 0 : i32
    return %arg0, %c0_i32, %arg1 : i32, i32, i32
  }
}

</mosaic_0001>

<llo_original>
// kernel: tpu_custom_call.1
$region0: #{tpu_custom_call.1}
  #allocation0 [shape = 'u32[]', space=smem, size = 0x4, offset = 0x4, fixed_abs, tag = 'smem constant byte address 0x4 - core index']
  #allocation1 [shape = 'u32[144,128]{1,0:T(1,128)}', space=vmem, size = 0x12000, scoped, tag = 'internal scratch']
  %s0 = inlined_call_operand.vmem [shape: f32[2,2,4,352], index: 0, kind: input, shape index: {}]
  %s1 = inlined_call_operand.vmem [shape: f32[9,8,4], index: 1, kind: input, shape index: {}]
  %s2 = inlined_call_operand.vmem [shape: f32[8,1], index: 2, kind: input, shape index: {}]
  %s3 = inlined_call_operand.vmem [shape: f32[8,1], index: 3, kind: input, shape index: {}]
  %s4 = inlined_call_operand.vmem [shape: f32[8,1], index: 4, kind: input, shape index: {}]
  %s5 = inlined_call_operand.vmem [shape: f32[24,8], index: 5, kind: input, shape index: {}]
  %s6 = inlined_call_operand.vmem [shape: f32[24,1], index: 6, kind: input, shape index: {}]
  %s7 = inlined_call_operand.vmem [shape: f32[8,8], index: 7, kind: input, shape index: {}]
  %s8 = inlined_call_operand.vmem [shape: f32[8,1], index: 8, kind: input, shape index: {}]
  %s9 = inlined_call_operand.vmem [shape: f32[16,8], index: 9, kind: input, shape index: {}]
  %s10 = inlined_call_operand.vmem [shape: f32[16,1], index: 10, kind: input, shape index: {}]
  %s11 = inlined_call_operand.hbm [shape: f32[2,16,512], index: 11, kind: output, shape index: {0}]
  %s12 = inlined_call_operand.hbm [shape: f32[2,16,512], index: 12, kind: output, shape index: {1}]
  %13 = xla_tuple %s11, %s12
  %s14 = sld [smem:[#allocation0]]
  $region85: #{tpu_custom_call.1} parent=0
    _
  %s16 = ssub.s32 1, %s14
  %s17 = scalar_select 0, %s16, %s14
  $region1: #{tpu_custom_call.1} parent=0
    #allocation2 [shape = 'u8[32768]{0}', space=vmem, size = 0x8000, scoped, tag = 'output window, operand 0']
    #allocation3 [shape = 's32[2]{0}', space=sflag, size = 0x8, scoped, tag = 'scoped memory for tpu_custom_call.1']
    #allocation4 [shape = 'u8[32768]{0}', space=vmem, size = 0x8000, scoped, tag = 'output window, operand 1']
    #allocation5 [shape = 's32[2]{0}', space=sflag, size = 0x8, scoped, tag = 'scoped memory for tpu_custom_call.1']
    %18 = vsyncpa [#allocation3], 0
    %s19 = scalar_lea.sflag [#allocation3], 1
    %20 = vsyncpa %s19, 0
    %21 = vsyncpa [#allocation5], 0
    %s22 = scalar_lea.sflag [#allocation5], 1
    %23 = vsyncpa %s22, 0
    loop: start=0, step=1, limit=6
    $region2: #{tpu_custom_call.1} parent=1 // loop_pre_header
      _
    $region3: #{tpu_custom_call.1} parent=1 // loop_header
      %s25 = sphi 0, %s29
      %p26 = scmp.ge.s32.totalorder %s25, 6
      %s32 = sphi 0, %s44
      %s33 = sphi 0, %s40
      %s34 = sphi 0, %s32
      %s35 = sphi 0, %s33
      %s36 = sphi 0, %s34
      %s37 = sphi 0, %s35
      %s49 = sphi 0, %s51
      %s52 = sphi 0, %s49
      %s53 = sphi 0, %s52
      %s69 = sphi 0, %s53
      %s73 = sphi 0, %s73
      %s75 = sphi 0, %s73
      %s76 = sphi 0, %s75
      %s90 = sphi 0, %s76
      %s94 = sphi 0, %s94
      %s96 = sphi 0, %s94
      %s97 = sphi 0, %s96
      %s111 = sphi 0, %s97
      %s115 = sphi 0, %s115
      %s117 = sphi 0, %s115
      %s118 = sphi 0, %s117
      %s132 = sphi 0, %s118
      %s136 = sphi 0, %s136
      %s138 = sphi 0, %s136
      %s139 = sphi 0, %s138
      %s153 = sphi 0, %s139
      %s157 = sphi 0, %s157
      %s159 = sphi 0, %s157
      %s160 = sphi 0, %s159
      %s174 = sphi 0, %s160
      %s178 = sphi 0, %s178
      %s180 = sphi 0, %s178
      %s181 = sphi 0, %s180
      %s195 = sphi 0, %s181
      %s199 = sphi 0, %s199
      %s201 = sphi 0, %s199
      %s202 = sphi 0, %s201
      %s216 = sphi 0, %s202
      %s220 = sphi 0, %s220
      %s222 = sphi 0, %s220
      %s223 = sphi 0, %s222
      %s237 = sphi 0, %s223
      %s241 = sphi 0, %s241
      %s243 = sphi 0, %s241
      %s244 = sphi 0, %s243
      %s258 = sphi 0, %s244
      %s262 = sphi 0, %s262
      %s264 = sphi 0, %s262
      %s265 = sphi 0, %s264
      %s279 = sphi 0, %s265
      %s287 = sphi 0, %s289
      %s290 = sphi 0, %s287
      %s291 = sphi 0, %s290
      %s307 = sphi 0, %s291
      %s315 = sphi 0, %s317
      %s318 = sphi 0, %s315
      %s319 = sphi 0, %s318
      %s335 = sphi 0, %s319
    $region4: #{tpu_custom_call.1} parent=1 // loop_header_branch
      %28 = sbr.rel (%p26) target = $region8
    $region5: #{tpu_custom_call.1} parent=1 // loop_body
      %s30 = ssub.s32 %s25, 1
      %s31 = ssub.s32 %s25, 2
      %s38 = sadd.s32 1, %s33
      %p39 = scmp.ge.s32.totalorder %s38, 2
      %s40 = scalar_select %p39, 0, %s38
      %s41 = sadd.s32 1, %s32
      %s42 = scalar_select %p39, %s41, %s32
      %p43 = scmp.ge.s32.totalorder %s42, 2
      %s44 = scalar_select %p43, 0, %s42
      %s45 = ssub.s32 %s32, %s44
      %s46 = ssub.s32 %s33, %s40
      %s47 = sor.u32 %s45, %s46
      %p48 = scmp.eq.s32.totalorder %s47, 0
      %s50 = sadd.s32 %s49, 1
      %s51 = scalar_select %p48, %s49, %s50
      %p54 = pneg %p48
      %p55 = scmp.eq.s32.totalorder %s25, 3
      %p56 = por %p54, %p55
      %p57 = scmp.ne.s32.totalorder %s49, %s52
      %p58 = scmp.eq.s32.totalorder %s25, 0
      %p59 = por %p57, %p58
      %p60 = scmp.ne.s32.totalorder %s49, %s52
      %p61 = scmp.eq.s32.totalorder %s30, 3
      %p62 = por %p60, %p61
      %p63 = scmp.ne.s32.totalorder %s52, %s53
      %p64 = scmp.eq.s32.totalorder %s30, 0
      %p65 = por %p63, %p64
      %p66 = scmp.ne.s32.totalorder %s52, %s53
      %p67 = scmp.eq.s32.totalorder %s31, 3
      %p68 = por %p66, %p67
      %p70 = scmp.ne.s32.totalorder %s53, %s69
      %p71 = scmp.eq.s32.totalorder %s31, 0
      %p72 = por %p70, %p71
      %s74 = sadd.s32 %s73, 1
      %p77 = scmp.eq.s32.totalorder %s25, 3
      %p78 = scmp.ne.s32.totalorder %s73, %s75
      %p79 = scmp.eq.s32.totalorder %s25, 0
      %p80 = por %p78, %p79
      %p81 = scmp.ne.s32.totalorder %s73, %s75
      %p82 = scmp.eq.s32.totalorder %s30, 3
      %p83 = por %p81, %p82
      %p84 = scmp.ne.s32.totalorder %s75, %s76
      %p85 = scmp.eq.s32.totalorder %s30, 0
      %p86 = por %p84, %p85
      %p87 = scmp.ne.s32.totalorder %s75, %s76
      %p88 = scmp.eq.s32.totalorder %s31, 3
      %p89 = por %p87, %p88
      %p91 = scmp.ne.s32.totalorder %s76, %s90
      %p92 = scmp.eq.s32.totalorder %s31, 0
      %p93 = por %p91, %p92
      %s95 = sadd.s32 %s94, 1
      %p98 = scmp.eq.s32.totalorder %s25, 3
      %p99 = scmp.ne.s32.totalorder %s94, %s96
      %p100 = scmp.eq.s32.totalorder %s25, 0
      %p101 = por %p99, %p100
      %p102 = scmp.ne.s32.totalorder %s94, %s96
      %p103 = scmp.eq.s32.totalorder %s30, 3
      %p104 = por %p102, %p103
      %p105 = scmp.ne.s32.totalorder %s96, %s97
      %p106 = scmp.eq.s32.totalorder %s30, 0
      %p107 = por %p105, %p106
      %p108 = scmp.ne.s32.totalorder %s96, %s97
      %p109 = scmp.eq.s32.totalorder %s31, 3
      %p110 = por %p108, %p109
      %p112 = scmp.ne.s32.totalorder %s97, %s111
      %p113 = scmp.eq.s32.totalorder %s31, 0
      %p114 = por %p112, %p113
      %s116 = sadd.s32 %s115, 1
      %p119 = scmp.eq.s32.totalorder %s25, 3
      %p120 = scmp.ne.s32.totalorder %s115, %s117
      %p121 = scmp.eq.s32.totalorder %s25, 0
      %p122 = por %p120, %p121
      %p123 = scmp.ne.s32.totalorder %s115, %s117
      %p124 = scmp.eq.s32.totalorder %s30, 3
      %p125 = por %p123, %p124
      %p126 = scmp.ne.s32.totalorder %s117, %s118
      %p127 = scmp.eq.s32.totalorder %s30, 0
      %p128 = por %p126, %p127
      %p129 = scmp.ne.s32.totalorder %s117, %s118
      %p130 = scmp.eq.s32.totalorder %s31, 3
      %p131 = por %p129, %p130
      %p133 = scmp.ne.s32.totalorder %s118, %s132
      %p134 = scmp.eq.s32.totalorder %s31, 0
      %p135 = por %p133, %p134
      %s137 = sadd.s32 %s136, 1
      %p140 = scmp.eq.s32.totalorder %s25, 3
      %p141 = scmp.ne.s32.totalorder %s136, %s138
      %p142 = scmp.eq.s32.totalorder %s25, 0
      %p143 = por %p141, %p142
      %p144 = scmp.ne.s32.totalorder %s136, %s138
      %p145 = scmp.eq.s32.totalorder %s30, 3
      %p146 = por %p144, %p145
      %p147 = scmp.ne.s32.totalorder %s138, %s139
      %p148 = scmp.eq.s32.totalorder %s30, 0
      %p149 = por %p147, %p148
      %p150 = scmp.ne.s32.totalorder %s138, %s139
      %p151 = scmp.eq.s32.totalorder %s31, 3
      %p152 = por %p150, %p151
      %p154 = scmp.ne.s32.totalorder %s139, %s153
      %p155 = scmp.eq.s32.totalorder %s31, 0
      %p156 = por %p154, %p155
      %s158 = sadd.s32 %s157, 1
      %p161 = scmp.eq.s32.totalorder %s25, 3
      %p162 = scmp.ne.s32.totalorder %s157, %s159
      %p163 = scmp.eq.s32.totalorder %s25, 0
      %p164 = por %p162, %p163
      %p165 = scmp.ne.s32.totalorder %s157, %s159
      %p166 = scmp.eq.s32.totalorder %s30, 3
      %p167 = por %p165, %p166
      %p168 = scmp.ne.s32.totalorder %s159, %s160
      %p169 = scmp.eq.s32.totalorder %s30, 0
      %p170 = por %p168, %p169
      %p171 = scmp.ne.s32.totalorder %s159, %s160
      %p172 = scmp.eq.s32.totalorder %s31, 3
      %p173 = por %p171, %p172
      %p175 = scmp.ne.s32.totalorder %s160, %s174
      %p176 = scmp.eq.s32.totalorder %s31, 0
      %p177 = por %p175, %p176
      %s179 = sadd.s32 %s178, 1
      %p182 = scmp.eq.s32.totalorder %s25, 3
      %p183 = scmp.ne.s32.totalorder %s178, %s180
      %p184 = scmp.eq.s32.totalorder %s25, 0
      %p185 = por %p183, %p184
      %p186 = scmp.ne.s32.totalorder %s178, %s180
      %p187 = scmp.eq.s32.totalorder %s30, 3
      %p188 = por %p186, %p187
      %p189 = scmp.ne.s32.totalorder %s180, %s181
      %p190 = scmp.eq.s32.totalorder %s30, 0
      %p191 = por %p189, %p190
      %p192 = scmp.ne.s32.totalorder %s180, %s181
      %p193 = scmp.eq.s32.totalorder %s31, 3
      %p194 = por %p192, %p193
      %p196 = scmp.ne.s32.totalorder %s181, %s195
      %p197 = scmp.eq.s32.totalorder %s31, 0
      %p198 = por %p196, %p197
      %s200 = sadd.s32 %s199, 1
      %p203 = scmp.eq.s32.totalorder %s25, 3
      %p204 = scmp.ne.s32.totalorder %s199, %s201
      %p205 = scmp.eq.s32.totalorder %s25, 0
      %p206 = por %p204, %p205
      %p207 = scmp.ne.s32.totalorder %s199, %s201
      %p208 = scmp.eq.s32.totalorder %s30, 3
      %p209 = por %p207, %p208
      %p210 = scmp.ne.s32.totalorder %s201, %s202
      %p211 = scmp.eq.s32.totalorder %s30, 0
      %p212 = por %p210, %p211
      %p213 = scmp.ne.s32.totalorder %s201, %s202
      %p214 = scmp.eq.s32.totalorder %s31, 3
      %p215 = por %p213, %p214
      %p217 = scmp.ne.s32.totalorder %s202, %s216
      %p218 = scmp.eq.s32.totalorder %s31, 0
      %p219 = por %p217, %p218
      %s221 = sadd.s32 %s220, 1
      %p224 = scmp.eq.s32.totalorder %s25, 3
      %p225 = scmp.ne.s32.totalorder %s220, %s222
      %p226 = scmp.eq.s32.totalorder %s25, 0
      %p227 = por %p225, %p226
      %p228 = scmp.ne.s32.totalorder %s220, %s222
      %p229 = scmp.eq.s32.totalorder %s30, 3
      %p230 = por %p228, %p229
      %p231 = scmp.ne.s32.totalorder %s222, %s223
      %p232 = scmp.eq.s32.totalorder %s30, 0
      %p233 = por %p231, %p232
      %p234 = scmp.ne.s32.totalorder %s222, %s223
      %p235 = scmp.eq.s32.totalorder %s31, 3
      %p236 = por %p234, %p235
      %p238 = scmp.ne.s32.totalorder %s223, %s237
      %p239 = scmp.eq.s32.totalorder %s31, 0
      %p240 = por %p238, %p239
      %s242 = sadd.s32 %s241, 1
      %p245 = scmp.eq.s32.totalorder %s25, 3
      %p246 = scmp.ne.s32.totalorder %s241, %s243
      %p247 = scmp.eq.s32.totalorder %s25, 0
      %p248 = por %p246, %p247
      %p249 = scmp.ne.s32.totalorder %s241, %s243
      %p250 = scmp.eq.s32.totalorder %s30, 3
      %p251 = por %p249, %p250
      %p252 = scmp.ne.s32.totalorder %s243, %s244
      %p253 = scmp.eq.s32.totalorder %s30, 0
      %p254 = por %p252, %p253
      %p255 = scmp.ne.s32.totalorder %s243, %s244
      %p256 = scmp.eq.s32.totalorder %s31, 3
      %p257 = por %p255, %p256
      %p259 = scmp.ne.s32.totalorder %s244, %s258
      %p260 = scmp.eq.s32.totalorder %s31, 0
      %p261 = por %p259, %p260
      %s263 = sadd.s32 %s262, 1
      %p266 = scmp.eq.s32.totalorder %s25, 3
      %p267 = scmp.ne.s32.totalorder %s262, %s264
      %p268 = scmp.eq.s32.totalorder %s25, 0
      %p269 = por %p267, %p268
      %p270 = scmp.ne.s32.totalorder %s262, %s264
      %p271 = scmp.eq.s32.totalorder %s30, 3
      %p272 = por %p270, %p271
      %p273 = scmp.ne.s32.totalorder %s264, %s265
      %p274 = scmp.eq.s32.totalorder %s30, 0
      %p275 = por %p273, %p274
      %p276 = scmp.ne.s32.totalorder %s264, %s265
      %p277 = scmp.eq.s32.totalorder %s31, 3
      %p278 = por %p276, %p277
      %p280 = scmp.ne.s32.totalorder %s265, %s279
      %p281 = scmp.eq.s32.totalorder %s31, 0
      %p282 = por %p280, %p281
      %s283 = ssub.s32 %s32, %s44
      %s284 = ssub.s32 %s33, %s40
      %s285 = sor.u32 %s283, %s284
      %p286 = scmp.eq.s32.totalorder %s285, 0
      %s288 = sadd.s32 %s287, 1
      %s289 = scalar_select %p286, %s287, %s288
      %p292 = pneg %p286
      %p293 = scmp.eq.s32.totalorder %s25, 3
      %p294 = por %p292, %p293
      %p295 = scmp.ne.s32.totalorder %s287, %s290
      %p296 = scmp.eq.s32.totalorder %s25, 0
      %p297 = por %p295, %p296
      %p298 = scmp.ne.s32.totalorder %s287, %s290
      %p299 = scmp.eq.s32.totalorder %s30, 3
      %p300 = por %p298, %p299
      %p301 = scmp.ne.s32.totalorder %s290, %s291
      %p302 = scmp.eq.s32.totalorder %s30, 0
      %p303 = por %p301, %p302
      %p304 = scmp.ne.s32.totalorder %s290, %s291
      %p305 = scmp.eq.s32.totalorder %s31, 3
      %p306 = por %p304, %p305
      %p308 = scmp.ne.s32.totalorder %s291, %s307
      %p309 = scmp.eq.s32.totalorder %s31, 0
      %p310 = por %p308, %p309
      %s311 = ssub.s32 %s32, %s44
      %s312 = ssub.s32 %s33, %s40
      %s313 = sor.u32 %s311, %s312
      %p314 = scmp.eq.s32.totalorder %s313, 0
      %s316 = sadd.s32 %s315, 1
      %s317 = scalar_select %p314, %s315, %s316
      %p320 = pneg %p314
      %p321 = scmp.eq.s32.totalorder %s25, 3
      %p322 = por %p320, %p321
      %p323 = scmp.ne.s32.totalorder %s315, %s318
      %p324 = scmp.eq.s32.totalorder %s25, 0
      %p325 = por %p323, %p324
      %p326 = scmp.ne.s32.totalorder %s315, %s318
      %p327 = scmp.eq.s32.totalorder %s30, 3
      %p328 = por %p326, %p327
      %p329 = scmp.ne.s32.totalorder %s318, %s319
      %p330 = scmp.eq.s32.totalorder %s30, 0
      %p331 = por %p329, %p330
      %p332 = scmp.ne.s32.totalorder %s318, %s319
      %p333 = scmp.eq.s32.totalorder %s31, 3
      %p334 = por %p332, %p333
      %p336 = scmp.ne.s32.totalorder %s319, %s335
      %p337 = scmp.eq.s32.totalorder %s31, 0
      %p338 = por %p336, %p337
      %p339 = scmp.le.s32.totalorder 1, %s25
      %p340 = scmp.lt.s32.totalorder %s25, 5
      %p341 = pnand %p339, %p340
      %p342 = pneg %p341
      // Predicated region
      $region9: #{tpu_custom_call.1} parent=5 // pred_check
        _
      $region10: #{tpu_custom_call.1} parent=5 // pred_check_branch
        %344 = sbr.rel (%p341) target = $region12
      $region11: #{tpu_custom_call.1} parent=5 // pred_region
        %s345 = ssub.s32 %s25, 1
        // Predicated region
        $region13: #{tpu_custom_call.1} parent=11 // pred_check
          %p346 = pneg %p86
        $region14: #{tpu_custom_call.1} parent=11 // pred_check_branch
          %348 = sbr.rel (%p346) target = $region16
        $region15: #{tpu_custom_call.1} parent=11 // pred_region
          _
        $region16: #{tpu_custom_call.1} parent=11 // pred_fallthru
          _
        // Predicated region
        $region17: #{tpu_custom_call.1} parent=11 // pred_check
          %p349 = pneg %p107
        $region18: #{tpu_custom_call.1} parent=11 // pred_check_branch
          %351 = sbr.rel (%p349) target = $region20
        $region19: #{tpu_custom_call.1} parent=11 // pred_region
          _
        $region20: #{tpu_custom_call.1} parent=11 // pred_fallthru
          _
        // Predicated region
        $region21: #{tpu_custom_call.1} parent=11 // pred_check
          %p352 = pneg %p128
        $region22: #{tpu_custom_call.1} parent=11 // pred_check_branch
          %354 = sbr.rel (%p352) target = $region24
        $region23: #{tpu_custom_call.1} parent=11 // pred_region
          _
        $region24: #{tpu_custom_call.1} parent=11 // pred_fallthru
          _
        // Predicated region
        $region25: #{tpu_custom_call.1} parent=11 // pred_check
          %p355 = pneg %p149
        $region26: #{tpu_custom_call.1} parent=11 // pred_check_branch
          %357 = sbr.rel (%p355) target = $region28
        $region27: #{tpu_custom_call.1} parent=11 // pred_region
          _
        $region28: #{tpu_custom_call.1} parent=11 // pred_fallthru
          _
        // Predicated region
        $region29: #{tpu_custom_call.1} parent=11 // pred_check
          %p358 = pneg %p170
        $region30: #{tpu_custom_call.1} parent=11 // pred_check_branch
          %360 = sbr.rel (%p358) target = $region32
        $region31: #{tpu_custom_call.1} parent=11 // pred_region
          _
        $region32: #{tpu_custom_call.1} parent=11 // pred_fallthru
          _
        // Predicated region
        $region33: #{tpu_custom_call.1} parent=11 // pred_check
          %p361 = pneg %p191
        $region34: #{tpu_custom_call.1} parent=11 // pred_check_branch
          %363 = sbr.rel (%p361) target = $region36
        $region35: #{tpu_custom_call.1} parent=11 // pred_region
          _
        $region36: #{tpu_custom_call.1} parent=11 // pred_fallthru
          _
        // Predicated region
        $region37: #{tpu_custom_call.1} parent=11 // pred_check
          %p364 = pneg %p212
        $region38: #{tpu_custom_call.1} parent=11 // pred_check_branch
          %366 = sbr.rel (%p364) target = $region40
        $region39: #{tpu_custom_call.1} parent=11 // pred_region
          _
        $region40: #{tpu_custom_call.1} parent=11 // pred_fallthru
          _
        // Predicated region
        $region41: #{tpu_custom_call.1} parent=11 // pred_check
          %p367 = pneg %p233
        $region42: #{tpu_custom_call.1} parent=11 // pred_check_branch
          %369 = sbr.rel (%p367) target = $region44
        $region43: #{tpu_custom_call.1} parent=11 // pred_region
          _
        $region44: #{tpu_custom_call.1} parent=11 // pred_fallthru
          _
        // Predicated region
        $region45: #{tpu_custom_call.1} parent=11 // pred_check
          %p370 = pneg %p254
        $region46: #{tpu_custom_call.1} parent=11 // pred_check_branch
          %372 = sbr.rel (%p370) target = $region48
        $region47: #{tpu_custom_call.1} parent=11 // pred_region
          _
        $region48: #{tpu_custom_call.1} parent=11 // pred_fallthru
          _
        // Predicated region
        $region49: #{tpu_custom_call.1} parent=11 // pred_check
          %p373 = pneg %p275
        $region50: #{tpu_custom_call.1} parent=11 // pred_check_branch
          %375 = sbr.rel (%p373) target = $region52
        $region51: #{tpu_custom_call.1} parent=11 // pred_region
          _
        $region52: #{tpu_custom_call.1} parent=11 // pred_fallthru
          _
      $region12: #{tpu_custom_call.1} parent=5 // pred_fallthru
        _
      %p376 = scmp.lt.s32.totalorder %s25, 4
      // Predicated region
      $region53: #{tpu_custom_call.1} parent=5 // pred_check
        %p377 = pneg %p376
      $region54: #{tpu_custom_call.1} parent=5 // pred_check_branch
        %379 = sbr.rel (%p377) target = $region56
      $region55: #{tpu_custom_call.1} parent=5 // pred_region
        // Predicated region
        $region57: #{tpu_custom_call.1} parent=55 // pred_check
          %p380 = pneg %p59
        $region58: #{tpu_custom_call.1} parent=55 // pred_check_branch
          %382 = sbr.rel (%p380) target = $region60
        $region59: #{tpu_custom_call.1} parent=55 // pred_region
          %p383 = scmp.lt.s32.totalorder %s32, 1
          %s384 = scalar_select %p383, %s32, 1
          %p385 = scmp.lt.s32.totalorder %s33, 1
          %s386 = scalar_select %p385, %s33, 1
          %s387 = smul.addr %s386, 3
          %s388 = smul.addr %s384, 6
          %s389 = sadd.s32 %s387, %s388
          %s390 = smul.addr %s389, 4
          %s391 = scalar_lea.vmem %s0, %s390
        $region60: #{tpu_custom_call.1} parent=55 // pred_fallthru
          _
      $region56: #{tpu_custom_call.1} parent=5 // pred_fallthru
        _
      %p392 = scmp.le.s32.totalorder 1, %s25
      %p393 = scmp.lt.s32.totalorder %s25, 5
      %p394 = pnand %p392, %p393
      %p395 = pneg %p394
      // Predicated region
      $region61: #{tpu_custom_call.1} parent=5 // pred_check
        _
      $region62: #{tpu_custom_call.1} parent=5 // pred_check_branch
        %397 = sbr.rel (%p394) target = $region64
      $region63: #{tpu_custom_call.1} parent=5 // pred_region
        %s398 = ssub.s32 %s25, 1
        %p399 = scmp.lt.s32.totalorder %s34, 1
        %s400 = scalar_select %p399, %s34, 1
        %p401 = scmp.lt.s32.totalorder %s35, 1
        %s402 = scalar_select %p401, %s35, 1
        %s403 = smul.addr %s402, 3
        %s404 = smul.addr %s400, 6
        %s405 = sadd.s32 %s403, %s404
        %s406 = smul.addr %s405, 4
        %s407 = scalar_lea.vmem %s0, %s406
        %p408 = pneg %p65
        %p409 = pneg %p62
        %p410 = pneg %p86
        %p411 = pneg %p83
        %p412 = pneg %p107
        %p413 = pneg %p104
        %p414 = pneg %p128
        %p415 = pneg %p125
        %p416 = pneg %p149
        %p417 = pneg %p146
        %p418 = pneg %p170
        %p419 = pneg %p167
        %p420 = pneg %p191
        %p421 = pneg %p188
        %p422 = pneg %p212
        %p423 = pneg %p209
        %p424 = pneg %p233
        %p425 = pneg %p230
        %p426 = pneg %p254
        %p427 = pneg %p251
        %p428 = pneg %p275
        %p429 = pneg %p272
        %p430 = pneg %p303
        %p431 = pneg %p300
        %s432 = sand.u32 %s290, 1
        %s433 = scalar_lea.sflag [#allocation3], %s432
        %s434 = sand.u32 %s290, 1
        %s435 = smul.addr %s434, 32
        %s436 = scalar_lea.vmem [#allocation2], %s435
        %p437 = pneg %p331
        %p438 = pneg %p328
        %s439 = sand.u32 %s318, 1
        %s440 = scalar_lea.sflag [#allocation5], %s439
        %s441 = sand.u32 %s318, 1
        %s442 = smul.addr %s441, 32
        %s443 = scalar_lea.vmem [#allocation4], %s442
        %p444 = scmp.lt.s32.totalorder %s34, 1
        %s445 = scalar_select %p444, %s34, 1
        %p446 = scmp.lt.s32.totalorder %s35, 1
        %s447 = scalar_select %p446, %s35, 1
        %s448 = smul.addr %s447, 3
        %s449 = smul.addr %s445, 6
        %s450 = sadd.s32 %s448, %s449
        %s451 = smul.addr %s450, 4
        %s452 = scalar_lea.vmem %s0, %s451
        %s453 = smul.u32 2, %s35
        %s454 = smul.u32 2, %s35
        %v455 = vld [vmem:[%s452] sm:$0xff]
        %v456 = vld [vmem:[%s452 + $0x8] sm:$0xf]
        %v457 = vld [vmem:[%s1] sm:$0xff]
        %s458 = scalar_lea.vmem %s1, 8
        %v459 = vld [vmem:[%s458] sm:$0xff]
        %v462 = vcombine.high %v455, %v455
        %463 = vrot.lane.b32.xlu0 %v455, 127
        %v464 = vpop.permute.xlu0 %463
        %465 = vrot.lane.b32.xlu0 %v462, 127
        %v466 = vpop.permute.xlu0 %465
        %467 = vrot.lane.b32.xlu0 %v456, 127
        %v468 = vpop.permute.xlu0 %467
        %vm469 = vcmask 1039360
        %v470 = vsel %vm469, %v464, %v466
        %v471 = vsel %vm469, %v466, %v468
        %vm472 = vcmask 31744
        %v474 = vsel %vm472, %v459, 0
        %vm476 = vcmask 1043456
        %v477 = vsel %vm476, %v470, 0
        %v479 = vsel %vm476, %v471, 0
        %481 = vmatprep.subr.mxu0 0.0
        %482 = vmatpush1.msra.mxu0 0.0
        %483 = vmatprep.subr.mxu0 0.0
        %484 = vmatpush1.msra.mxu0 0.0
        %485 = vmatprep.subr.mxu0 0.0
        %486 = vmatpush1.msra.mxu0 0.0
        %487 = vmatprep.subr.mxu0 0.0
        %488 = vmatpush1.msra.mxu0 0.0
        %489 = vmatprep.subr.mxu0 0.0
        %490 = vmatpush1.msra.mxu0 0.0
        %491 = vmatprep.subr.mxu0 0.0
        %492 = vmatpush1.msra.mxu0 0.0
        %493 = vmatprep.subr.mxu0 0.0
        %494 = vmatpush1.msra.mxu0 0.0
        %495 = vmatprep.subr.mxu0 0.0
        %496 = vmatpush1.msra.mxu0 0.0
        %497 = vmatprep.subr.mxu0 0.0
        %498 = vmatpush1.msra.mxu0 0.0
        %499 = vmatprep.subr.mxu0 0.0
        %500 = vmatpush1.msra.mxu0 0.0
        %501 = vmatprep.subr.mxu0 0.0
        %502 = vmatpush1.msra.mxu0 0.0
        %503 = vmatprep.subr.mxu0 0.0
        %504 = vmatpush1.msra.mxu0 0.0
        %505 = vmatprep.subr.mxu0 0.0
        %506 = vmatpush1.msra.mxu0 0.0
        %507 = vmatprep.subr.mxu0 0.0
        %508 = vmatpush1.msra.mxu0 0.0
        %509 = vmatprep.subr.mxu0 0.0
        %510 = vmatpush1.msra.mxu0 0.0
        %511 = vmatprep.subr.mxu0 %v479
        %512 = vmatpush1.msra.mxu0 %v477
        %513 = vmatprep.subr.mxu0 0.0
        %514 = vmatpush2.msra.mxu0 0.0
        %515 = vmatprep.subr.mxu0 0.0
        %516 = vmatpush2.msra.mxu0 0.0
        %517 = vmatprep.subr.mxu0 0.0
        %518 = vmatpush2.msra.mxu0 0.0
        %519 = vmatprep.subr.mxu0 0.0
        %520 = vmatpush2.msra.mxu0 0.0
        %521 = vmatprep.subr.mxu0 0.0
        %522 = vmatpush2.msra.mxu0 0.0
        %523 = vmatprep.subr.mxu0 0.0
        %524 = vmatpush2.msra.mxu0 0.0
        %525 = vmatprep.subr.mxu0 0.0
        %526 = vmatpush2.msra.mxu0 0.0
        %527 = vmatprep.subr.mxu0 0.0
        %528 = vmatpush2.msra.mxu0 0.0
        %529 = vmatprep.subr.mxu0 0.0
        %530 = vmatpush2.msra.mxu0 0.0
        %531 = vmatprep.subr.mxu0 0.0
        %532 = vmatpush2.msra.mxu0 0.0
        %533 = vmatprep.subr.mxu0 0.0
        %534 = vmatpush2.msra.mxu0 0.0
        %535 = vmatprep.subr.mxu0 0.0
        %536 = vmatpush2.msra.mxu0 0.0
        %537 = vmatprep.subr.mxu0 0.0
        %538 = vmatpush2.msra.mxu0 0.0
        %539 = vmatprep.subr.mxu0 0.0
        %540 = vmatpush2.msra.mxu0 0.0
        %541 = vmatprep.subr.mxu0 0.0
        %542 = vmatpush2.msra.mxu0 0.0
        %543 = vmatprep.subr.mxu0 0.0
        %544 = vmatpush2.msra.mxu0 0.0
        %545 = vmatprep.mubr.f32.mxu0 0.0
        %546 = vmatmul.mubr.f32.gmra.mxu0 %v474
        %v547 = vpop.f32.mrf.mxu0
        %v548 = vadd.f32 0.0, %v547
        %v549 = vpop.f32.mrf.mxu0
        %v550 = vadd.f32 0.0, %v549
        %551 = vdwg.mxu0
        %v553 = vsel %vm472, %v457, 0
        %v555 = vsel %vm476, %v455, 0
        %v557 = vsel %vm476, %v462, 0
        %559 = vmatprep.subr.mxu0 0.0
        %560 = vmatpush1.msra.mxu0 0.0
        %561 = vmatprep.subr.mxu0 0.0
        %562 = vmatpush1.msra.mxu0 0.0
        %563 = vmatprep.subr.mxu0 0.0
        %564 = vmatpush1.msra.mxu0 0.0
        %565 = vmatprep.subr.mxu0 0.0
        %566 = vmatpush1.msra.mxu0 0.0
        %567 = vmatprep.subr.mxu0 0.0
        %568 = vmatpush1.msra.mxu0 0.0
        %569 = vmatprep.subr.mxu0 0.0
        %570 = vmatpush1.msra.mxu0 0.0
        %571 = vmatprep.subr.mxu0 0.0
        %572 = vmatpush1.msra.mxu0 0.0
        %573 = vmatprep.subr.mxu0 0.0
        %574 = vmatpush1.msra.mxu0 0.0
        %575 = vmatprep.subr.mxu0 0.0
        %576 = vmatpush1.msra.mxu0 0.0
        %577 = vmatprep.subr.mxu0 0.0
        %578 = vmatpush1.msra.mxu0 0.0
        %579 = vmatprep.subr.mxu0 0.0
        %580 = vmatpush1.msra.mxu0 0.0
        %581 = vmatprep.subr.mxu0 0.0
        %582 = vmatpush1.msra.mxu0 0.0
        %583 = vmatprep.subr.mxu0 0.0
        %584 = vmatpush1.msra.mxu0 0.0
        %585 = vmatprep.subr.mxu0 0.0
        %586 = vmatpush1.msra.mxu0 0.0
        %587 = vmatprep.subr.mxu0 0.0
        %588 = vmatpush1.msra.mxu0 0.0
        %589 = vmatprep.subr.mxu0 %v557
        %590 = vmatpush1.msra.mxu0 %v555
        %591 = vmatprep.subr.mxu0 0.0
        %592 = vmatpush2.msra.mxu0 0.0
        %593 = vmatprep.subr.mxu0 0.0
        %594 = vmatpush2.msra.mxu0 0.0
        %595 = vmatprep.subr.mxu0 0.0
        %596 = vmatpush2.msra.mxu0 0.0
        %597 = vmatprep.subr.mxu0 0.0
        %598 = vmatpush2.msra.mxu0 0.0
        %599 = vmatprep.subr.mxu0 0.0
        %600 = vmatpush2.msra.mxu0 0.0
        %601 = vmatprep.subr.mxu0 0.0
        %602 = vmatpush2.msra.mxu0 0.0
        %603 = vmatprep.subr.mxu0 0.0
        %604 = vmatpush2.msra.mxu0 0.0
        %605 = vmatprep.subr.mxu0 0.0
        %606 = vmatpush2.msra.mxu0 0.0
        %607 = vmatprep.subr.mxu0 0.0
        %608 = vmatpush2.msra.mxu0 0.0
        %609 = vmatprep.subr.mxu0 0.0
        %610 = vmatpush2.msra.mxu0 0.0
        %611 = vmatprep.subr.mxu0 0.0
        %612 = vmatpush2.msra.mxu0 0.0
        %613 = vmatprep.subr.mxu0 0.0
        %614 = vmatpush2.msra.mxu0 0.0
        %615 = vmatprep.subr.mxu0 0.0
        %616 = vmatpush2.msra.mxu0 0.0
        %617 = vmatprep.subr.mxu0 0.0
        %618 = vmatpush2.msra.mxu0 0.0
        %619 = vmatprep.subr.mxu0 0.0
        %620 = vmatpush2.msra.mxu0 0.0
        %621 = vmatprep.subr.mxu0 0.0
        %622 = vmatpush2.msra.mxu0 0.0
        %623 = vmatprep.mubr.f32.mxu0 0.0
        %624 = vmatmul.mubr.f32.gmra.mxu0 %v553
        %v625 = vpop.f32.mrf.mxu0
        %v626 = vadd.f32 %v548, %v625
        %v627 = vpop.f32.mrf.mxu0
        %v628 = vadd.f32 %v550, %v627
        %629 = vdwg.mxu0
        %s630 = scalar_lea.vmem %s1, 16
        %v631 = vld [vmem:[%s630] sm:$0xff]
        %632 = vrot.lane.b32.xlu0 %v455, 126
        %v633 = vpop.permute.xlu0 %632
        %634 = vrot.lane.b32.xlu0 %v462, 126
        %v635 = vpop.permute.xlu0 %634
        %636 = vrot.lane.b32.xlu0 %v456, 126
        %v637 = vpop.permute.xlu0 %636
        %vm638 = vcmask 1031168
        %v639 = vsel %vm638, %v633, %v635
        %v640 = vsel %vm638, %v635, %v637
        %v642 = vsel %vm472, %v631, 0
        %v644 = vsel %vm476, %v639, 0
        %v646 = vsel %vm476, %v640, 0
        %648 = vmatprep.subr.mxu0 0.0
        %649 = vmatpush1.msra.mxu0 0.0
        %650 = vmatprep.subr.mxu0 0.0
        %651 = vmatpush1.msra.mxu0 0.0
        %652 = vmatprep.subr.mxu0 0.0
        %653 = vmatpush1.msra.mxu0 0.0
        %654 = vmatprep.subr.mxu0 0.0
        %655 = vmatpush1.msra.mxu0 0.0
        %656 = vmatprep.subr.mxu0 0.0
        %657 = vmatpush1.msra.mxu0 0.0
        %658 = vmatprep.subr.mxu0 0.0
        %659 = vmatpush1.msra.mxu0 0.0
        %660 = vmatprep.subr.mxu0 0.0
        %661 = vmatpush1.msra.mxu0 0.0
        %662 = vmatprep.subr.mxu0 0.0
        %663 = vmatpush1.msra.mxu0 0.0
        %664 = vmatprep.subr.mxu0 0.0
        %665 = vmatpush1.msra.mxu0 0.0
        %666 = vmatprep.subr.mxu0 0.0
        %667 = vmatpush1.msra.mxu0 0.0
        %668 = vmatprep.subr.mxu0 0.0
        %669 = vmatpush1.msra.mxu0 0.0
        %670 = vmatprep.subr.mxu0 0.0
        %671 = vmatpush1.msra.mxu0 0.0
        %672 = vmatprep.subr.mxu0 0.0
        %673 = vmatpush1.msra.mxu0 0.0
        %674 = vmatprep.subr.mxu0 0.0
        %675 = vmatpush1.msra.mxu0 0.0
        %676 = vmatprep.subr.mxu0 0.0
        %677 = vmatpush1.msra.mxu0 0.0
        %678 = vmatprep.subr.mxu0 %v646
        %679 = vmatpush1.msra.mxu0 %v644
        %680 = vmatprep.subr.mxu0 0.0
        %681 = vmatpush2.msra.mxu0 0.0
        %682 = vmatprep.subr.mxu0 0.0
        %683 = vmatpush2.msra.mxu0 0.0
        %684 = vmatprep.subr.mxu0 0.0
        %685 = vmatpush2.msra.mxu0 0.0
        %686 = vmatprep.subr.mxu0 0.0
        %687 = vmatpush2.msra.mxu0 0.0
        %688 = vmatprep.subr.mxu0 0.0
        %689 = vmatpush2.msra.mxu0 0.0
        %690 = vmatprep.subr.mxu0 0.0
        %691 = vmatpush2.msra.mxu0 0.0
        %692 = vmatprep.subr.mxu0 0.0
        %693 = vmatpush2.msra.mxu0 0.0
        %694 = vmatprep.subr.mxu0 0.0
        %695 = vmatpush2.msra.mxu0 0.0
        %696 = vmatprep.subr.mxu0 0.0
        %697 = vmatpush2.msra.mxu0 0.0
        %698 = vmatprep.subr.mxu0 0.0
        %699 = vmatpush2.msra.mxu0 0.0
        %700 = vmatprep.subr.mxu0 0.0
        %701 = vmatpush2.msra.mxu0 0.0
        %702 = vmatprep.subr.mxu0 0.0
        %703 = vmatpush2.msra.mxu0 0.0
        %704 = vmatprep.subr.mxu0 0.0
        %705 = vmatpush2.msra.mxu0 0.0
        %706 = vmatprep.subr.mxu0 0.0
        %707 = vmatpush2.msra.mxu0 0.0
        %708 = vmatprep.subr.mxu0 0.0
        %709 = vmatpush2.msra.mxu0 0.0
        %710 = vmatprep.subr.mxu0 0.0
        %711 = vmatpush2.msra.mxu0 0.0
        %712 = vmatprep.mubr.f32.mxu0 0.0
        %713 = vmatmul.mubr.f32.gmra.mxu0 %v642
        %v714 = vpop.f32.mrf.mxu0
        %v715 = vadd.f32 0.0, %v714
        %v716 = vpop.f32.mrf.mxu0
        %v717 = vadd.f32 0.0, %v716
        %718 = vdwg.mxu0
        %v719 = vadd.f32 %v626, %v715
        %v720 = vadd.f32 %v628, %v717
        %s721 = scalar_lea.vmem %s1, 24
        %v722 = vld [vmem:[%s721] sm:$0xff]
        %723 = vrot.lane.b32.xlu0 %v455, 96
        %v724 = vpop.permute.xlu0 %723
        %725 = vrot.lane.b32.xlu0 %v462, 96
        %v726 = vpop.permute.xlu0 %725
        %727 = vrot.lane.b32.xlu0 %v456, 96
        %v728 = vpop.permute.xlu0 %727
        %vm729 = vcmask 785408
        %v730 = vsel %vm729, %v724, %v726
        %v731 = vsel %vm729, %v726, %v728
        %v733 = vsel %vm472, %v722, 0
        %v735 = vsel %vm476, %v730, 0
        %v737 = vsel %vm476, %v731, 0
        %739 = vmatprep.subr.mxu0 0.0
        %740 = vmatpush1.msra.mxu0 0.0
        %741 = vmatprep.subr.mxu0 0.0
        %742 = vmatpush1.msra.mxu0 0.0
        %743 = vmatprep.subr.mxu0 0.0
        %744 = vmatpush1.msra.mxu0 0.0
        %745 = vmatprep.subr.mxu0 0.0
        %746 = vmatpush1.msra.mxu0 0.0
        %747 = vmatprep.subr.mxu0 0.0
        %748 = vmatpush1.msra.mxu0 0.0
        %749 = vmatprep.subr.mxu0 0.0
        %750 = vmatpush1.msra.mxu0 0.0
        %751 = vmatprep.subr.mxu0 0.0
        %752 = vmatpush1.msra.mxu0 0.0
        %753 = vmatprep.subr.mxu0 0.0
        %754 = vmatpush1.msra.mxu0 0.0
        %755 = vmatprep.subr.mxu0 0.0
        %756 = vmatpush1.msra.mxu0 0.0
        %757 = vmatprep.subr.mxu0 0.0
        %758 = vmatpush1.msra.mxu0 0.0
        %759 = vmatprep.subr.mxu0 0.0
        %760 = vmatpush1.msra.mxu0 0.0
        %761 = vmatprep.subr.mxu0 0.0
        %762 = vmatpush1.msra.mxu0 0.0
        %763 = vmatprep.subr.mxu0 0.0
        %764 = vmatpush1.msra.mxu0 0.0
        %765 = vmatprep.subr.mxu0 0.0
        %766 = vmatpush1.msra.mxu0 0.0
        %767 = vmatprep.subr.mxu0 0.0
        %768 = vmatpush1.msra.mxu0 0.0
        %769 = vmatprep.subr.mxu0 %v737
        %770 = vmatpush1.msra.mxu0 %v735
        %771 = vmatprep.subr.mxu0 0.0
        %772 = vmatpush2.msra.mxu0 0.0
        %773 = vmatprep.subr.mxu0 0.0
        %774 = vmatpush2.msra.mxu0 0.0
        %775 = vmatprep.subr.mxu0 0.0
        %776 = vmatpush2.msra.mxu0 0.0
        %777 = vmatprep.subr.mxu0 0.0
        %778 = vmatpush2.msra.mxu0 0.0
        %779 = vmatprep.subr.mxu0 0.0
        %780 = vmatpush2.msra.mxu0 0.0
        %781 = vmatprep.subr.mxu0 0.0
        %782 = vmatpush2.msra.mxu0 0.0
        %783 = vmatprep.subr.mxu0 0.0
        %784 = vmatpush2.msra.mxu0 0.0
        %785 = vmatprep.subr.mxu0 0.0
        %786 = vmatpush2.msra.mxu0 0.0
        %787 = vmatprep.subr.mxu0 0.0
        %788 = vmatpush2.msra.mxu0 0.0
        %789 = vmatprep.subr.mxu0 0.0
        %790 = vmatpush2.msra.mxu0 0.0
        %791 = vmatprep.subr.mxu0 0.0
        %792 = vmatpush2.msra.mxu0 0.0
        %793 = vmatprep.subr.mxu0 0.0
        %794 = vmatpush2.msra.mxu0 0.0
        %795 = vmatprep.subr.mxu0 0.0
        %796 = vmatpush2.msra.mxu0 0.0
        %797 = vmatprep.subr.mxu0 0.0
        %798 = vmatpush2.msra.mxu0 0.0
        %799 = vmatprep.subr.mxu0 0.0
        %800 = vmatpush2.msra.mxu0 0.0
        %801 = vmatprep.subr.mxu0 0.0
        %802 = vmatpush2.msra.mxu0 0.0
        %803 = vmatprep.mubr.f32.mxu0 0.0
        %804 = vmatmul.mubr.f32.gmra.mxu0 %v733
        %v805 = vpop.f32.mrf.mxu0
        %v806 = vadd.f32 0.0, %v805
        %v807 = vpop.f32.mrf.mxu0
        %v808 = vadd.f32 0.0, %v807
        %809 = vdwg.mxu0
        %v810 = vadd.f32 %v719, %v806
        %v811 = vadd.f32 %v720, %v808
        %s812 = scalar_lea.vmem %s1, 32
        %v813 = vld [vmem:[%s812] sm:$0xff]
        %814 = vrot.lane.b32.xlu0 %v455, 95
        %v815 = vpop.permute.xlu0 %814
        %816 = vrot.lane.b32.xlu0 %v462, 95
        %v817 = vpop.permute.xlu0 %816
        %818 = vrot.lane.b32.xlu0 %v456, 95
        %v819 = vpop.permute.xlu0 %818
        %vm820 = vcmask 777216
        %v821 = vsel %vm820, %v815, %v817
        %v822 = vsel %vm820, %v817, %v819
        %v824 = vsel %vm472, %v813, 0
        %v826 = vsel %vm476, %v821, 0
        %v828 = vsel %vm476, %v822, 0
        %830 = vmatprep.subr.mxu0 0.0
        %831 = vmatpush1.msra.mxu0 0.0
        %832 = vmatprep.subr.mxu0 0.0
        %833 = vmatpush1.msra.mxu0 0.0
        %834 = vmatprep.subr.mxu0 0.0
        %835 = vmatpush1.msra.mxu0 0.0
        %836 = vmatprep.subr.mxu0 0.0
        %837 = vmatpush1.msra.mxu0 0.0
        %838 = vmatprep.subr.mxu0 0.0
        %839 = vmatpush1.msra.mxu0 0.0
        %840 = vmatprep.subr.mxu0 0.0
        %841 = vmatpush1.msra.mxu0 0.0
        %842 = vmatprep.subr.mxu0 0.0
        %843 = vmatpush1.msra.mxu0 0.0
        %844 = vmatprep.subr.mxu0 0.0
        %845 = vmatpush1.msra.mxu0 0.0
        %846 = vmatprep.subr.mxu0 0.0
        %847 = vmatpush1.msra.mxu0 0.0
        %848 = vmatprep.subr.mxu0 0.0
        %849 = vmatpush1.msra.mxu0 0.0
        %850 = vmatprep.subr.mxu0 0.0
        %851 = vmatpush1.msra.mxu0 0.0
        %852 = vmatprep.subr.mxu0 0.0
        %853 = vmatpush1.msra.mxu0 0.0
        %854 = vmatprep.subr.mxu0 0.0
        %855 = vmatpush1.msra.mxu0 0.0
        %856 = vmatprep.subr.mxu0 0.0
        %857 = vmatpush1.msra.mxu0 0.0
        %858 = vmatprep.subr.mxu0 0.0
        %859 = vmatpush1.msra.mxu0 0.0
        %860 = vmatprep.subr.mxu0 %v828
        %861 = vmatpush1.msra.mxu0 %v826
        %862 = vmatprep.subr.mxu0 0.0
        %863 = vmatpush2.msra.mxu0 0.0
        %864 = vmatprep.subr.mxu0 0.0
        %865 = vmatpush2.msra.mxu0 0.0
        %866 = vmatprep.subr.mxu0 0.0
        %867 = vmatpush2.msra.mxu0 0.0
        %868 = vmatprep.subr.mxu0 0.0
        %869 = vmatpush2.msra.mxu0 0.0
        %870 = vmatprep.subr.mxu0 0.0
        %871 = vmatpush2.msra.mxu0 0.0
        %872 = vmatprep.subr.mxu0 0.0
        %873 = vmatpush2.msra.mxu0 0.0
        %874 = vmatprep.subr.mxu0 0.0
        %875 = vmatpush2.msra.mxu0 0.0
        %876 = vmatprep.subr.mxu0 0.0
        %877 = vmatpush2.msra.mxu0 0.0
        %878 = vmatprep.subr.mxu0 0.0
        %879 = vmatpush2.msra.mxu0 0.0
        %880 = vmatprep.subr.mxu0 0.0
        %881 = vmatpush2.msra.mxu0 0.0
        %882 = vmatprep.subr.mxu0 0.0
        %883 = vmatpush2.msra.mxu0 0.0
        %884 = vmatprep.subr.mxu0 0.0
        %885 = vmatpush2.msra.mxu0 0.0
        %886 = vmatprep.subr.mxu0 0.0
        %887 = vmatpush2.msra.mxu0 0.0
        %888 = vmatprep.subr.mxu0 0.0
        %889 = vmatpush2.msra.mxu0 0.0
        %890 = vmatprep.subr.mxu0 0.0
        %891 = vmatpush2.msra.mxu0 0.0
        %892 = vmatprep.subr.mxu0 0.0
        %893 = vmatpush2.msra.mxu0 0.0
        %894 = vmatprep.mubr.f32.mxu0 0.0
        %895 = vmatmul.mubr.f32.gmra.mxu0 %v824
        %v896 = vpop.f32.mrf.mxu0
        %v897 = vadd.f32 0.0, %v896
        %v898 = vpop.f32.mrf.mxu0
        %v899 = vadd.f32 0.0, %v898
        %900 = vdwg.mxu0
        %v901 = vadd.f32 %v810, %v897
        %v902 = vadd.f32 %v811, %v899
        %s903 = scalar_lea.vmem %s1, 40
        %v904 = vld [vmem:[%s903] sm:$0xff]
        %905 = vrot.lane.b32.xlu0 %v455, 94
        %v906 = vpop.permute.xlu0 %905
        %907 = vrot.lane.b32.xlu0 %v462, 94
        %v908 = vpop.permute.xlu0 %907
        %909 = vrot.lane.b32.xlu0 %v456, 94
        %v910 = vpop.permute.xlu0 %909
        %vm911 = vcmask 769024
        %v912 = vsel %vm911, %v906, %v908
        %v913 = vsel %vm911, %v908, %v910
        %v915 = vsel %vm472, %v904, 0
        %v917 = vsel %vm476, %v912, 0
        %v919 = vsel %vm476, %v913, 0
        %921 = vmatprep.subr.mxu0 0.0
        %922 = vmatpush1.msra.mxu0 0.0
        %923 = vmatprep.subr.mxu0 0.0
        %924 = vmatpush1.msra.mxu0 0.0
        %925 = vmatprep.subr.mxu0 0.0
        %926 = vmatpush1.msra.mxu0 0.0
        %927 = vmatprep.subr.mxu0 0.0
        %928 = vmatpush1.msra.mxu0 0.0
        %929 = vmatprep.subr.mxu0 0.0
        %930 = vmatpush1.msra.mxu0 0.0
        %931 = vmatprep.subr.mxu0 0.0
        %932 = vmatpush1.msra.mxu0 0.0
        %933 = vmatprep.subr.mxu0 0.0
        %934 = vmatpush1.msra.mxu0 0.0
        %935 = vmatprep.subr.mxu0 0.0
        %936 = vmatpush1.msra.mxu0 0.0
        %937 = vmatprep.subr.mxu0 0.0
        %938 = vmatpush1.msra.mxu0 0.0
        %939 = vmatprep.subr.mxu0 0.0
        %940 = vmatpush1.msra.mxu0 0.0
        %941 = vmatprep.subr.mxu0 0.0
        %942 = vmatpush1.msra.mxu0 0.0
        %943 = vmatprep.subr.mxu0 0.0
        %944 = vmatpush1.msra.mxu0 0.0
        %945 = vmatprep.subr.mxu0 0.0
        %946 = vmatpush1.msra.mxu0 0.0
        %947 = vmatprep.subr.mxu0 0.0
        %948 = vmatpush1.msra.mxu0 0.0
        %949 = vmatprep.subr.mxu0 0.0
        %950 = vmatpush1.msra.mxu0 0.0
        %951 = vmatprep.subr.mxu0 %v919
        %952 = vmatpush1.msra.mxu0 %v917
        %953 = vmatprep.subr.mxu0 0.0
        %954 = vmatpush2.msra.mxu0 0.0
        %955 = vmatprep.subr.mxu0 0.0
        %956 = vmatpush2.msra.mxu0 0.0
        %957 = vmatprep.subr.mxu0 0.0
        %958 = vmatpush2.msra.mxu0 0.0
        %959 = vmatprep.subr.mxu0 0.0
        %960 = vmatpush2.msra.mxu0 0.0
        %961 = vmatprep.subr.mxu0 0.0
        %962 = vmatpush2.msra.mxu0 0.0
        %963 = vmatprep.subr.mxu0 0.0
        %964 = vmatpush2.msra.mxu0 0.0
        %965 = vmatprep.subr.mxu0 0.0
        %966 = vmatpush2.msra.mxu0 0.0
        %967 = vmatprep.subr.mxu0 0.0
        %968 = vmatpush2.msra.mxu0 0.0
        %969 = vmatprep.subr.mxu0 0.0
        %970 = vmatpush2.msra.mxu0 0.0
        %971 = vmatprep.subr.mxu0 0.0
        %972 = vmatpush2.msra.mxu0 0.0
        %973 = vmatprep.subr.mxu0 0.0
        %974 = vmatpush2.msra.mxu0 0.0
        %975 = vmatprep.subr.mxu0 0.0
        %976 = vmatpush2.msra.mxu0 0.0
        %977 = vmatprep.subr.mxu0 0.0
        %978 = vmatpush2.msra.mxu0 0.0
        %979 = vmatprep.subr.mxu0 0.0
        %980 = vmatpush2.msra.mxu0 0.0
        %981 = vmatprep.subr.mxu0 0.0
        %982 = vmatpush2.msra.mxu0 0.0
        %983 = vmatprep.subr.mxu0 0.0
        %984 = vmatpush2.msra.mxu0 0.0
        %985 = vmatprep.mubr.f32.mxu0 0.0
        %986 = vmatmul.mubr.f32.gmra.mxu0 %v915
        %v987 = vpop.f32.mrf.mxu0
        %v988 = vadd.f32 0.0, %v987
        %v989 = vpop.f32.mrf.mxu0
        %v990 = vadd.f32 0.0, %v989
        %991 = vdwg.mxu0
        %v992 = vadd.f32 %v901, %v988
        %v993 = vadd.f32 %v902, %v990
        %s994 = scalar_lea.vmem %s1, 48
        %v995 = vld [vmem:[%s994] sm:$0xff]
        %996 = vrot.lane.b32.xlu0 %v455, 64
        %v997 = vpop.permute.xlu0 %996
        %998 = vrot.lane.b32.xlu0 %v462, 64
        %v999 = vpop.permute.xlu0 %998
        %1000 = vrot.lane.b32.xlu0 %v456, 64
        %v1001 = vpop.permute.xlu0 %1000
        %vm1002 = vcmask 523264
        %v1003 = vsel %vm1002, %v997, %v999
        %v1004 = vsel %vm1002, %v999, %v1001
        %v1006 = vsel %vm472, %v995, 0
        %v1008 = vsel %vm476, %v1003, 0
        %v1010 = vsel %vm476, %v1004, 0
        %1012 = vmatprep.subr.mxu0 0.0
        %1013 = vmatpush1.msra.mxu0 0.0
        %1014 = vmatprep.subr.mxu0 0.0
        %1015 = vmatpush1.msra.mxu0 0.0
        %1016 = vmatprep.subr.mxu0 0.0
        %1017 = vmatpush1.msra.mxu0 0.0
        %1018 = vmatprep.subr.mxu0 0.0
        %1019 = vmatpush1.msra.mxu0 0.0
        %1020 = vmatprep.subr.mxu0 0.0
        %1021 = vmatpush1.msra.mxu0 0.0
        %1022 = vmatprep.subr.mxu0 0.0
        %1023 = vmatpush1.msra.mxu0 0.0
        %1024 = vmatprep.subr.mxu0 0.0
        %1025 = vmatpush1.msra.mxu0 0.0
        %1026 = vmatprep.subr.mxu0 0.0
        %1027 = vmatpush1.msra.mxu0 0.0
        %1028 = vmatprep.subr.mxu0 0.0
        %1029 = vmatpush1.msra.mxu0 0.0
        %1030 = vmatprep.subr.mxu0 0.0
        %1031 = vmatpush1.msra.mxu0 0.0
        %1032 = vmatprep.subr.mxu0 0.0
        %1033 = vmatpush1.msra.mxu0 0.0
        %1034 = vmatprep.subr.mxu0 0.0
        %1035 = vmatpush1.msra.mxu0 0.0
        %1036 = vmatprep.subr.mxu0 0.0
        %1037 = vmatpush1.msra.mxu0 0.0
        %1038 = vmatprep.subr.mxu0 0.0
        %1039 = vmatpush1.msra.mxu0 0.0
        %1040 = vmatprep.subr.mxu0 0.0
        %1041 = vmatpush1.msra.mxu0 0.0
        %1042 = vmatprep.subr.mxu0 %v1010
        %1043 = vmatpush1.msra.mxu0 %v1008
        %1044 = vmatprep.subr.mxu0 0.0
        %1045 = vmatpush2.msra.mxu0 0.0
        %1046 = vmatprep.subr.mxu0 0.0
        %1047 = vmatpush2.msra.mxu0 0.0
        %1048 = vmatprep.subr.mxu0 0.0
        %1049 = vmatpush2.msra.mxu0 0.0
        %1050 = vmatprep.subr.mxu0 0.0
        %1051 = vmatpush2.msra.mxu0 0.0
        %1052 = vmatprep.subr.mxu0 0.0
        %1053 = vmatpush2.msra.mxu0 0.0
        %1054 = vmatprep.subr.mxu0 0.0
        %1055 = vmatpush2.msra.mxu0 0.0
        %1056 = vmatprep.subr.mxu0 0.0
        %1057 = vmatpush2.msra.mxu0 0.0
        %1058 = vmatprep.subr.mxu0 0.0
        %1059 = vmatpush2.msra.mxu0 0.0
        %1060 = vmatprep.subr.mxu0 0.0
        %1061 = vmatpush2.msra.mxu0 0.0
        %1062 = vmatprep.subr.mxu0 0.0
        %1063 = vmatpush2.msra.mxu0 0.0
        %1064 = vmatprep.subr.mxu0 0.0
        %1065 = vmatpush2.msra.mxu0 0.0
        %1066 = vmatprep.subr.mxu0 0.0
        %1067 = vmatpush2.msra.mxu0 0.0
        %1068 = vmatprep.subr.mxu0 0.0
        %1069 = vmatpush2.msra.mxu0 0.0
        %1070 = vmatprep.subr.mxu0 0.0
        %1071 = vmatpush2.msra.mxu0 0.0
        %1072 = vmatprep.subr.mxu0 0.0
        %1073 = vmatpush2.msra.mxu0 0.0
        %1074 = vmatprep.subr.mxu0 0.0
        %1075 = vmatpush2.msra.mxu0 0.0
        %1076 = vmatprep.mubr.f32.mxu0 0.0
        %1077 = vmatmul.mubr.f32.gmra.mxu0 %v1006
        %v1078 = vpop.f32.mrf.mxu0
        %v1079 = vadd.f32 0.0, %v1078
        %v1080 = vpop.f32.mrf.mxu0
        %v1081 = vadd.f32 0.0, %v1080
        %1082 = vdwg.mxu0
        %v1083 = vadd.f32 %v992, %v1079
        %v1084 = vadd.f32 %v993, %v1081
        %s1085 = scalar_lea.vmem %s1, 56
        %v1086 = vld [vmem:[%s1085] sm:$0xff]
        %1087 = vrot.lane.b32.xlu0 %v455, 63
        %v1088 = vpop.permute.xlu0 %1087
        %1089 = vrot.lane.b32.xlu0 %v462, 63
        %v1090 = vpop.permute.xlu0 %1089
        %1091 = vrot.lane.b32.xlu0 %v456, 63
        %v1092 = vpop.permute.xlu0 %1091
        %vm1093 = vcmask 515072
        %v1094 = vsel %vm1093, %v1088, %v1090
        %v1095 = vsel %vm1093, %v1090, %v1092
        %v1097 = vsel %vm472, %v1086, 0
        %v1099 = vsel %vm476, %v1094, 0
        %v1101 = vsel %vm476, %v1095, 0
        %1103 = vmatprep.subr.mxu0 0.0
        %1104 = vmatpush1.msra.mxu0 0.0
        %1105 = vmatprep.subr.mxu0 0.0
        %1106 = vmatpush1.msra.mxu0 0.0
        %1107 = vmatprep.subr.mxu0 0.0
        %1108 = vmatpush1.msra.mxu0 0.0
        %1109 = vmatprep.subr.mxu0 0.0
        %1110 = vmatpush1.msra.mxu0 0.0
        %1111 = vmatprep.subr.mxu0 0.0
        %1112 = vmatpush1.msra.mxu0 0.0
        %1113 = vmatprep.subr.mxu0 0.0
        %1114 = vmatpush1.msra.mxu0 0.0
        %1115 = vmatprep.subr.mxu0 0.0
        %1116 = vmatpush1.msra.mxu0 0.0
        %1117 = vmatprep.subr.mxu0 0.0
        %1118 = vmatpush1.msra.mxu0 0.0
        %1119 = vmatprep.subr.mxu0 0.0
        %1120 = vmatpush1.msra.mxu0 0.0
        %1121 = vmatprep.subr.mxu0 0.0
        %1122 = vmatpush1.msra.mxu0 0.0
        %1123 = vmatprep.subr.mxu0 0.0
        %1124 = vmatpush1.msra.mxu0 0.0
        %1125 = vmatprep.subr.mxu0 0.0
        %1126 = vmatpush1.msra.mxu0 0.0
        %1127 = vmatprep.subr.mxu0 0.0
        %1128 = vmatpush1.msra.mxu0 0.0
        %1129 = vmatprep.subr.mxu0 0.0
        %1130 = vmatpush1.msra.mxu0 0.0
        %1131 = vmatprep.subr.mxu0 0.0
        %1132 = vmatpush1.msra.mxu0 0.0
        %1133 = vmatprep.subr.mxu0 %v1101
        %1134 = vmatpush1.msra.mxu0 %v1099
        %1135 = vmatprep.subr.mxu0 0.0
        %1136 = vmatpush2.msra.mxu0 0.0
        %1137 = vmatprep.subr.mxu0 0.0
        %1138 = vmatpush2.msra.mxu0 0.0
        %1139 = vmatprep.subr.mxu0 0.0
        %1140 = vmatpush2.msra.mxu0 0.0
        %1141 = vmatprep.subr.mxu0 0.0
        %1142 = vmatpush2.msra.mxu0 0.0
        %1143 = vmatprep.subr.mxu0 0.0
        %1144 = vmatpush2.msra.mxu0 0.0
        %1145 = vmatprep.subr.mxu0 0.0
        %1146 = vmatpush2.msra.mxu0 0.0
        %1147 = vmatprep.subr.mxu0 0.0
        %1148 = vmatpush2.msra.mxu0 0.0
        %1149 = vmatprep.subr.mxu0 0.0
        %1150 = vmatpush2.msra.mxu0 0.0
        %1151 = vmatprep.subr.mxu0 0.0
        %1152 = vmatpush2.msra.mxu0 0.0
        %1153 = vmatprep.subr.mxu0 0.0
        %1154 = vmatpush2.msra.mxu0 0.0
        %1155 = vmatprep.subr.mxu0 0.0
        %1156 = vmatpush2.msra.mxu0 0.0
        %1157 = vmatprep.subr.mxu0 0.0
        %1158 = vmatpush2.msra.mxu0 0.0
        %1159 = vmatprep.subr.mxu0 0.0
        %1160 = vmatpush2.msra.mxu0 0.0
        %1161 = vmatprep.subr.mxu0 0.0
        %1162 = vmatpush2.msra.mxu0 0.0
        %1163 = vmatprep.subr.mxu0 0.0
        %1164 = vmatpush2.msra.mxu0 0.0
        %1165 = vmatprep.subr.mxu0 0.0
        %1166 = vmatpush2.msra.mxu0 0.0
        %1167 = vmatprep.mubr.f32.mxu0 0.0
        %1168 = vmatmul.mubr.f32.gmra.mxu0 %v1097
        %v1169 = vpop.f32.mrf.mxu0
        %v1170 = vadd.f32 0.0, %v1169
        %v1171 = vpop.f32.mrf.mxu0
        %v1172 = vadd.f32 0.0, %v1171
        %1173 = vdwg.mxu0
        %v1174 = vadd.f32 %v1083, %v1170
        %v1175 = vadd.f32 %v1084, %v1172
        %s1176 = scalar_lea.vmem %s1, 64
        %v1177 = vld [vmem:[%s1176] sm:$0xff]
        %1178 = vrot.lane.b32.xlu0 %v455, 62
        %v1179 = vpop.permute.xlu0 %1178
        %1180 = vrot.lane.b32.xlu0 %v462, 62
        %v1181 = vpop.permute.xlu0 %1180
        %1182 = vrot.lane.b32.xlu0 %v456, 62
        %v1183 = vpop.permute.xlu0 %1182
        %vm1184 = vcmask 506880
        %v1185 = vsel %vm1184, %v1179, %v1181
        %v1186 = vsel %vm1184, %v1181, %v1183
        %v1188 = vsel %vm472, %v1177, 0
        %v1190 = vsel %vm476, %v1185, 0
        %v1192 = vsel %vm476, %v1186, 0
        %1194 = vmatprep.subr.mxu0 0.0
        %1195 = vmatpush1.msra.mxu0 0.0
        %1196 = vmatprep.subr.mxu0 0.0
        %1197 = vmatpush1.msra.mxu0 0.0
        %1198 = vmatprep.subr.mxu0 0.0
        %1199 = vmatpush1.msra.mxu0 0.0
        %1200 = vmatprep.subr.mxu0 0.0
        %1201 = vmatpush1.msra.mxu0 0.0
        %1202 = vmatprep.subr.mxu0 0.0
        %1203 = vmatpush1.msra.mxu0 0.0
        %1204 = vmatprep.subr.mxu0 0.0
        %1205 = vmatpush1.msra.mxu0 0.0
        %1206 = vmatprep.subr.mxu0 0.0
        %1207 = vmatpush1.msra.mxu0 0.0
        %1208 = vmatprep.subr.mxu0 0.0
        %1209 = vmatpush1.msra.mxu0 0.0
        %1210 = vmatprep.subr.mxu0 0.0
        %1211 = vmatpush1.msra.mxu0 0.0
        %1212 = vmatprep.subr.mxu0 0.0
        %1213 = vmatpush1.msra.mxu0 0.0
        %1214 = vmatprep.subr.mxu0 0.0
        %1215 = vmatpush1.msra.mxu0 0.0
        %1216 = vmatprep.subr.mxu0 0.0
        %1217 = vmatpush1.msra.mxu0 0.0
        %1218 = vmatprep.subr.mxu0 0.0
        %1219 = vmatpush1.msra.mxu0 0.0
        %1220 = vmatprep.subr.mxu0 0.0
        %1221 = vmatpush1.msra.mxu0 0.0
        %1222 = vmatprep.subr.mxu0 0.0
        %1223 = vmatpush1.msra.mxu0 0.0
        %1224 = vmatprep.subr.mxu0 %v1192
        %1225 = vmatpush1.msra.mxu0 %v1190
        %1226 = vmatprep.subr.mxu0 0.0
        %1227 = vmatpush2.msra.mxu0 0.0
        %1228 = vmatprep.subr.mxu0 0.0
        %1229 = vmatpush2.msra.mxu0 0.0
        %1230 = vmatprep.subr.mxu0 0.0
        %1231 = vmatpush2.msra.mxu0 0.0
        %1232 = vmatprep.subr.mxu0 0.0
        %1233 = vmatpush2.msra.mxu0 0.0
        %1234 = vmatprep.subr.mxu0 0.0
        %1235 = vmatpush2.msra.mxu0 0.0
        %1236 = vmatprep.subr.mxu0 0.0
        %1237 = vmatpush2.msra.mxu0 0.0
        %1238 = vmatprep.subr.mxu0 0.0
        %1239 = vmatpush2.msra.mxu0 0.0
        %1240 = vmatprep.subr.mxu0 0.0
        %1241 = vmatpush2.msra.mxu0 0.0
        %1242 = vmatprep.subr.mxu0 0.0
        %1243 = vmatpush2.msra.mxu0 0.0
        %1244 = vmatprep.subr.mxu0 0.0
        %1245 = vmatpush2.msra.mxu0 0.0
        %1246 = vmatprep.subr.mxu0 0.0
        %1247 = vmatpush2.msra.mxu0 0.0
        %1248 = vmatprep.subr.mxu0 0.0
        %1249 = vmatpush2.msra.mxu0 0.0
        %1250 = vmatprep.subr.mxu0 0.0
        %1251 = vmatpush2.msra.mxu0 0.0
        %1252 = vmatprep.subr.mxu0 0.0
        %1253 = vmatpush2.msra.mxu0 0.0
        %1254 = vmatprep.subr.mxu0 0.0
        %1255 = vmatpush2.msra.mxu0 0.0
        %1256 = vmatprep.subr.mxu0 0.0
        %1257 = vmatpush2.msra.mxu0 0.0
        %1258 = vmatprep.mubr.f32.mxu0 0.0
        %1259 = vmatmul.mubr.f32.gmra.mxu0 %v1188
        %v1260 = vpop.f32.mrf.mxu0
        %v1261 = vadd.f32 0.0, %v1260
        %v1262 = vpop.f32.mrf.mxu0
        %v1263 = vadd.f32 0.0, %v1262
        %1264 = vdwg.mxu0
        %v1265 = vadd.f32 %v1174, %v1261
        %v1266 = vadd.f32 %v1175, %v1263
        %v1267 = vld [vmem:[%s2] sm:$0xff]
        %1269 = vset.pattern.permute.xlu0 0
        %1270 = vperm.xlu0 %1269, %v1267
        %v1271 = vpop.permute.xlu0 %1270
        %v1273 = vadd.f32 %v1265, %v1271
        %v1274 = vadd.f32 %v1266, %v1271
        %v1275 = vrot.slane %v1273, 4
        %v1276 = vadd.f32 %v1273, %v1275
        %v1277 = vrot.slane %v1276, 2
        %v1278 = vadd.f32 %v1276, %v1277
        %v1279 = vrot.slane %v1278, 1
        %v1280 = vadd.f32 %v1278, %v1279
        %v1281 = vrot.slane %v1274, 4
        %v1282 = vadd.f32 %v1274, %v1281
        %v1283 = vrot.slane %v1282, 2
        %v1284 = vadd.f32 %v1282, %v1283
        %v1285 = vrot.slane %v1284, 1
        %v1286 = vadd.f32 %v1284, %v1285
        %v1287 = vrcp.pop 8.0
        %v1288 = vmul.f32 %v1280, %v1287
        %v1289 = vmul.f32 %v1286, %v1287
        %v1290 = vsub.f32 %v1273, %v1288
        %v1291 = vsub.f32 %v1274, %v1289
        %v1292 = vmul.f32 %v1290, %v1290
        %v1293 = vmul.f32 %v1291, %v1291
        %v1294 = vrot.slane %v1292, 4
        %v1295 = vadd.f32 %v1292, %v1294
        %v1296 = vrot.slane %v1295, 2
        %v1297 = vadd.f32 %v1295, %v1296
        %v1298 = vrot.slane %v1297, 1
        %v1299 = vadd.f32 %v1297, %v1298
        %v1300 = vrot.slane %v1293, 4
        %v1301 = vadd.f32 %v1293, %v1300
        %v1302 = vrot.slane %v1301, 2
        %v1303 = vadd.f32 %v1301, %v1302
        %v1304 = vrot.slane %v1303, 1
        %v1305 = vadd.f32 %v1303, %v1304
        %v1306 = vmul.f32 %v1299, %v1287
        %v1307 = vmul.f32 %v1305, %v1287
        %v1308 = vadd.f32 %v1306, 1e-06
        %v1309 = vadd.f32 %v1307, 1e-06
        %v1310 = vrsqrt.pop %v1308
        %v1311 = vrsqrt.pop %v1309
        %v1312 = vmul.f32 %v1290, %v1310
        %v1313 = vmul.f32 %v1291, %v1311
        %v1314 = vld [vmem:[%s3] sm:$0xff]
        %1316 = vset.pattern.permute.xlu0 0
        %1317 = vperm.xlu0 %1316, %v1314
        %v1318 = vpop.permute.xlu0 %1317
        %v1320 = vmul.f32 %v1312, %v1318
        %v1321 = vmul.f32 %v1313, %v1318
        %v1322 = vld [vmem:[%s4] sm:$0xff]
        %1324 = vset.pattern.permute.xlu0 0
        %1325 = vperm.xlu0 %1324, %v1322
        %v1326 = vpop.permute.xlu0 %1325
        %v1328 = vadd.f32 %v1320, %v1326
        %v1329 = vadd.f32 %v1321, %v1326
        %v1330 = vmul.f32 %v1328, 0.5
        %v1331 = vmul.f32 %v1329, 0.5
        %v1332 = vmul.f32 %v1328, 0.044715
        %v1333 = vmul.f32 %v1329, 0.044715
        %v1334 = vmul.f32 %v1332, %v1328
        %v1335 = vmul.f32 %v1333, %v1329
        %v1336 = vmul.f32 %v1334, %v1328
        %v1337 = vmul.f32 %v1335, %v1329
        %v1338 = vadd.f32 %v1328, %v1336
        %v1339 = vadd.f32 %v1329, %v1337
        %v1340 = vmul.f32 %v1338, 0.7978846
        %v1341 = vmul.f32 %v1339, 0.7978846
        %v1342 = vtanh.pop %v1340
        %v1343 = vtanh.pop %v1341
        %v1344 = vadd.f32 %v1342, 1.0
        %v1345 = vadd.f32 %v1343, 1.0
        %v1346 = vmul.f32 %v1330, %v1344
        %v1347 = vmul.f32 %v1331, %v1345
        %v1348 = vld [vmem:[%s5] sm:$0xff]
        %v1349 = vld [vmem:[%s5 + $0x8] sm:$0xff]
        %v1350 = vld [vmem:[%s5 + $0x10] sm:$0xff]
        %v1351 = vld [vmem:[%s6] sm:$0xff]
        %v1352 = vld [vmem:[%s6 + $0x8] sm:$0xff]
        %v1353 = vld [vmem:[%s6 + $0x10] sm:$0xff]
        %1355 = vset.pattern.permute.xlu0 0
        %1356 = vperm.xlu0 %1355, %v1351
        %v1357 = vpop.permute.xlu0 %1356
        %1360 = vset.pattern.permute.xlu0 0
        %1361 = vperm.xlu0 %1360, %v1352
        %v1362 = vpop.permute.xlu0 %1361
        %1365 = vset.pattern.permute.xlu0 0
        %1366 = vperm.xlu0 %1365, %v1353
        %v1367 = vpop.permute.xlu0 %1366
        %vm1369 = vcmask 64512
        %v1371 = vsel %vm1369, %v1348, 0
        %v1374 = vsel %vm1369, %v1349, 0
        %v1377 = vsel %vm1369, %v1350, 0
        %1379 = vmatprep.subr.mxu0 0.0
        %1380 = vmatpush1.msra.mxu0 0.0
        %1381 = vmatprep.subr.mxu0 0.0
        %1382 = vmatpush1.msra.mxu0 0.0
        %1383 = vmatprep.subr.mxu0 0.0
        %1384 = vmatpush1.msra.mxu0 0.0
        %1385 = vmatprep.subr.mxu0 0.0
        %1386 = vmatpush1.msra.mxu0 0.0
        %1387 = vmatprep.subr.mxu0 0.0
        %1388 = vmatpush1.msra.mxu0 0.0
        %1389 = vmatprep.subr.mxu0 0.0
        %1390 = vmatpush1.msra.mxu0 0.0
        %1391 = vmatprep.subr.mxu0 0.0
        %1392 = vmatpush1.msra.mxu0 0.0
        %1393 = vmatprep.subr.mxu0 0.0
        %1394 = vmatpush1.msra.mxu0 0.0
        %1395 = vmatprep.subr.mxu0 0.0
        %1396 = vmatpush1.msra.mxu0 0.0
        %1397 = vmatprep.subr.mxu0 0.0
        %1398 = vmatpush1.msra.mxu0 0.0
        %1399 = vmatprep.subr.mxu0 0.0
        %1400 = vmatpush1.msra.mxu0 0.0
        %1401 = vmatprep.subr.mxu0 0.0
        %1402 = vmatpush1.msra.mxu0 0.0
        %1403 = vmatprep.subr.mxu0 0.0
        %1404 = vmatpush1.msra.mxu0 0.0
        %1405 = vmatprep.subr.mxu0 0.0
        %1406 = vmatpush1.msra.mxu0 0.0
        %1407 = vmatprep.subr.mxu0 0.0
        %1408 = vmatpush1.msra.mxu0 0.0
        %1409 = vmatprep.subr.mxu0 %v1347
        %1410 = vmatpush1.msra.mxu0 %v1346
        %1411 = vmatprep.subr.mxu0 0.0
        %1412 = vmatpush2.msra.mxu0 0.0
        %1413 = vmatprep.subr.mxu0 0.0
        %1414 = vmatpush2.msra.mxu0 0.0
        %1415 = vmatprep.subr.mxu0 0.0
        %1416 = vmatpush2.msra.mxu0 0.0
        %1417 = vmatprep.subr.mxu0 0.0
        %1418 = vmatpush2.msra.mxu0 0.0
        %1419 = vmatprep.subr.mxu0 0.0
        %1420 = vmatpush2.msra.mxu0 0.0
        %1421 = vmatprep.subr.mxu0 0.0
        %1422 = vmatpush2.msra.mxu0 0.0
        %1423 = vmatprep.subr.mxu0 0.0
        %1424 = vmatpush2.msra.mxu0 0.0
        %1425 = vmatprep.subr.mxu0 0.0
        %1426 = vmatpush2.msra.mxu0 0.0
        %1427 = vmatprep.subr.mxu0 0.0
        %1428 = vmatpush2.msra.mxu0 0.0
        %1429 = vmatprep.subr.mxu0 0.0
        %1430 = vmatpush2.msra.mxu0 0.0
        %1431 = vmatprep.subr.mxu0 0.0
        %1432 = vmatpush2.msra.mxu0 0.0
        %1433 = vmatprep.subr.mxu0 0.0
        %1434 = vmatpush2.msra.mxu0 0.0
        %1435 = vmatprep.subr.mxu0 0.0
        %1436 = vmatpush2.msra.mxu0 0.0
        %1437 = vmatprep.subr.mxu0 0.0
        %1438 = vmatpush2.msra.mxu0 0.0
        %1439 = vmatprep.subr.mxu0 0.0
        %1440 = vmatpush2.msra.mxu0 0.0
        %1441 = vmatprep.subr.mxu0 0.0
        %1442 = vmatpush2.msra.mxu0 0.0
        %1443 = vmatprep.mubr.f32.mxu0 0.0
        %1444 = vmatmul.mubr.f32.gmra.mxu0 %v1371
        %v1445 = vpop.f32.mrf.mxu0
        %v1446 = vadd.f32 %v1357, %v1445
        %v1447 = vpop.f32.mrf.mxu0
        %v1448 = vadd.f32 %v1357, %v1447
        %1449 = vmatprep.mubr.f32.mxu0 0.0
        %1450 = vmatmul.mubr.f32.gmra.mxu0 %v1374
        %v1451 = vpop.f32.mrf.mxu0
        %v1452 = vadd.f32 %v1362, %v1451
        %v1453 = vpop.f32.mrf.mxu0
        %v1454 = vadd.f32 %v1362, %v1453
        %1455 = vmatprep.mubr.f32.mxu0 0.0
        %1456 = vmatmul.mubr.f32.gmra.mxu0 %v1377
        %v1457 = vpop.f32.mrf.mxu0
        %v1458 = vadd.f32 %v1367, %v1457
        %v1459 = vpop.f32.mrf.mxu0
        %v1460 = vadd.f32 %v1367, %v1459
        %1461 = vdwg.mxu0
        %1462 = vst [vmem:[%s436] sm:$0xff] %v1446
        %1463 = vst [vmem:[%s436 + $0x8] sm:$0xff] %v1448
        %1464 = vst [vmem:[%s436 + $0x10] sm:$0xff] %v1452
        %1465 = vst [vmem:[%s436 + $0x18] sm:$0xff] %v1454
        %v1466 = vmul.f32 %v1458, %v1346
        %v1467 = vmul.f32 %v1460, %v1347
        %v1468 = vsub.f32 0.0, %v1466
        %v1469 = vsub.f32 0.0, %v1467
        %v1470 = vmul.f32 %v1468, 1.442695
        %v1471 = vpow.pop %v1470
        %v1472 = vmul.f32 %v1469, 1.442695
        %v1473 = vpow.pop %v1472
        %v1474 = vadd.f32 %v1471, 1.0
        %v1475 = vadd.f32 %v1473, 1.0
        %v1476 = vrcp.pop %v1474
        %v1477 = vrcp.pop %v1475
        %v1478 = vmul.f32 %v1476, %v1346
        %v1479 = vmul.f32 %v1477, %v1347
        %v1480 = vld [vmem:[%s7] sm:$0xff]
        %v1481 = vld [vmem:[%s8] sm:$0xff]
        %1483 = vset.pattern.permute.xlu0 0
        %1484 = vperm.xlu0 %1483, %v1481
        %v1485 = vpop.permute.xlu0 %1484
        %v1488 = vsel %vm1369, %v1480, 0
        %1490 = vmatprep.subr.mxu0 0.0
        %1491 = vmatpush1.msra.mxu0 0.0
        %1492 = vmatprep.subr.mxu0 0.0
        %1493 = vmatpush1.msra.mxu0 0.0
        %1494 = vmatprep.subr.mxu0 0.0
        %1495 = vmatpush1.msra.mxu0 0.0
        %1496 = vmatprep.subr.mxu0 0.0
        %1497 = vmatpush1.msra.mxu0 0.0
        %1498 = vmatprep.subr.mxu0 0.0
        %1499 = vmatpush1.msra.mxu0 0.0
        %1500 = vmatprep.subr.mxu0 0.0
        %1501 = vmatpush1.msra.mxu0 0.0
        %1502 = vmatprep.subr.mxu0 0.0
        %1503 = vmatpush1.msra.mxu0 0.0
        %1504 = vmatprep.subr.mxu0 0.0
        %1505 = vmatpush1.msra.mxu0 0.0
        %1506 = vmatprep.subr.mxu0 0.0
        %1507 = vmatpush1.msra.mxu0 0.0
        %1508 = vmatprep.subr.mxu0 0.0
        %1509 = vmatpush1.msra.mxu0 0.0
        %1510 = vmatprep.subr.mxu0 0.0
        %1511 = vmatpush1.msra.mxu0 0.0
        %1512 = vmatprep.subr.mxu0 0.0
        %1513 = vmatpush1.msra.mxu0 0.0
        %1514 = vmatprep.subr.mxu0 0.0
        %1515 = vmatpush1.msra.mxu0 0.0
        %1516 = vmatprep.subr.mxu0 0.0
        %1517 = vmatpush1.msra.mxu0 0.0
        %1518 = vmatprep.subr.mxu0 0.0
        %1519 = vmatpush1.msra.mxu0 0.0
        %1520 = vmatprep.subr.mxu0 %v1479
        %1521 = vmatpush1.msra.mxu0 %v1478
        %1522 = vmatprep.subr.mxu0 0.0
        %1523 = vmatpush2.msra.mxu0 0.0
        %1524 = vmatprep.subr.mxu0 0.0
        %1525 = vmatpush2.msra.mxu0 0.0
        %1526 = vmatprep.subr.mxu0 0.0
        %1527 = vmatpush2.msra.mxu0 0.0
        %1528 = vmatprep.subr.mxu0 0.0
        %1529 = vmatpush2.msra.mxu0 0.0
        %1530 = vmatprep.subr.mxu0 0.0
        %1531 = vmatpush2.msra.mxu0 0.0
        %1532 = vmatprep.subr.mxu0 0.0
        %1533 = vmatpush2.msra.mxu0 0.0
        %1534 = vmatprep.subr.mxu0 0.0
        %1535 = vmatpush2.msra.mxu0 0.0
        %1536 = vmatprep.subr.mxu0 0.0
        %1537 = vmatpush2.msra.mxu0 0.0
        %1538 = vmatprep.subr.mxu0 0.0
        %1539 = vmatpush2.msra.mxu0 0.0
        %1540 = vmatprep.subr.mxu0 0.0
        %1541 = vmatpush2.msra.mxu0 0.0
        %1542 = vmatprep.subr.mxu0 0.0
        %1543 = vmatpush2.msra.mxu0 0.0
        %1544 = vmatprep.subr.mxu0 0.0
        %1545 = vmatpush2.msra.mxu0 0.0
        %1546 = vmatprep.subr.mxu0 0.0
        %1547 = vmatpush2.msra.mxu0 0.0
        %1548 = vmatprep.subr.mxu0 0.0
        %1549 = vmatpush2.msra.mxu0 0.0
        %1550 = vmatprep.subr.mxu0 0.0
        %1551 = vmatpush2.msra.mxu0 0.0
        %1552 = vmatprep.subr.mxu0 0.0
        %1553 = vmatpush2.msra.mxu0 0.0
        %1554 = vmatprep.mubr.f32.mxu0 0.0
        %1555 = vmatmul.mubr.f32.gmra.mxu0 %v1488
        %v1556 = vpop.f32.mrf.mxu0
        %v1557 = vadd.f32 %v1485, %v1556
        %v1558 = vpop.f32.mrf.mxu0
        %v1559 = vadd.f32 %v1485, %v1558
        %1560 = vdwg.mxu0
        %v1561 = vmul.f32 %v1557, 0.5
        %v1562 = vmul.f32 %v1559, 0.5
        %v1563 = vmul.f32 %v1557, 0.044715
        %v1564 = vmul.f32 %v1559, 0.044715
        %v1565 = vmul.f32 %v1563, %v1557
        %v1566 = vmul.f32 %v1564, %v1559
        %v1567 = vmul.f32 %v1565, %v1557
        %v1568 = vmul.f32 %v1566, %v1559
        %v1569 = vadd.f32 %v1557, %v1567
        %v1570 = vadd.f32 %v1559, %v1568
        %v1571 = vmul.f32 %v1569, 0.7978846
        %v1572 = vmul.f32 %v1570, 0.7978846
        %v1573 = vtanh.pop %v1571
        %v1574 = vtanh.pop %v1572
        %v1575 = vadd.f32 %v1573, 1.0
        %v1576 = vadd.f32 %v1574, 1.0
        %v1577 = vmul.f32 %v1561, %v1575
        %v1578 = vmul.f32 %v1562, %v1576
        %v1579 = vld [vmem:[%s9] sm:$0xff]
        %v1580 = vld [vmem:[%s9 + $0x8] sm:$0xff]
        %v1581 = vld [vmem:[%s10] sm:$0xff]
        %v1582 = vld [vmem:[%s10 + $0x8] sm:$0xff]
        %1584 = vset.pattern.permute.xlu0 0
        %1585 = vperm.xlu0 %1584, %v1581
        %v1586 = vpop.permute.xlu0 %1585
        %1589 = vset.pattern.permute.xlu0 0
        %1590 = vperm.xlu0 %1589, %v1582
        %v1591 = vpop.permute.xlu0 %1590
        %v1594 = vsel %vm1369, %v1579, 0
        %v1597 = vsel %vm1369, %v1580, 0
        %1599 = vmatprep.subr.mxu0 0.0
        %1600 = vmatpush1.msra.mxu0 0.0
        %1601 = vmatprep.subr.mxu0 0.0
        %1602 = vmatpush1.msra.mxu0 0.0
        %1603 = vmatprep.subr.mxu0 0.0
        %1604 = vmatpush1.msra.mxu0 0.0
        %1605 = vmatprep.subr.mxu0 0.0
        %1606 = vmatpush1.msra.mxu0 0.0
        %1607 = vmatprep.subr.mxu0 0.0
        %1608 = vmatpush1.msra.mxu0 0.0
        %1609 = vmatprep.subr.mxu0 0.0
        %1610 = vmatpush1.msra.mxu0 0.0
        %1611 = vmatprep.subr.mxu0 0.0
        %1612 = vmatpush1.msra.mxu0 0.0
        %1613 = vmatprep.subr.mxu0 0.0
        %1614 = vmatpush1.msra.mxu0 0.0
        %1615 = vmatprep.subr.mxu0 0.0
        %1616 = vmatpush1.msra.mxu0 0.0
        %1617 = vmatprep.subr.mxu0 0.0
        %1618 = vmatpush1.msra.mxu0 0.0
        %1619 = vmatprep.subr.mxu0 0.0
        %1620 = vmatpush1.msra.mxu0 0.0
        %1621 = vmatprep.subr.mxu0 0.0
        %1622 = vmatpush1.msra.mxu0 0.0
        %1623 = vmatprep.subr.mxu0 0.0
        %1624 = vmatpush1.msra.mxu0 0.0
        %1625 = vmatprep.subr.mxu0 0.0
        %1626 = vmatpush1.msra.mxu0 0.0
        %1627 = vmatprep.subr.mxu0 0.0
        %1628 = vmatpush1.msra.mxu0 0.0
        %1629 = vmatprep.subr.mxu0 %v1578
        %1630 = vmatpush1.msra.mxu0 %v1577
        %1631 = vmatprep.subr.mxu0 0.0
        %1632 = vmatpush2.msra.mxu0 0.0
        %1633 = vmatprep.subr.mxu0 0.0
        %1634 = vmatpush2.msra.mxu0 0.0
        %1635 = vmatprep.subr.mxu0 0.0
        %1636 = vmatpush2.msra.mxu0 0.0
        %1637 = vmatprep.subr.mxu0 0.0
        %1638 = vmatpush2.msra.mxu0 0.0
        %1639 = vmatprep.subr.mxu0 0.0
        %1640 = vmatpush2.msra.mxu0 0.0
        %1641 = vmatprep.subr.mxu0 0.0
        %1642 = vmatpush2.msra.mxu0 0.0
        %1643 = vmatprep.subr.mxu0 0.0
        %1644 = vmatpush2.msra.mxu0 0.0
        %1645 = vmatprep.subr.mxu0 0.0
        %1646 = vmatpush2.msra.mxu0 0.0
        %1647 = vmatprep.subr.mxu0 0.0
        %1648 = vmatpush2.msra.mxu0 0.0
        %1649 = vmatprep.subr.mxu0 0.0
        %1650 = vmatpush2.msra.mxu0 0.0
        %1651 = vmatprep.subr.mxu0 0.0
        %1652 = vmatpush2.msra.mxu0 0.0
        %1653 = vmatprep.subr.mxu0 0.0
        %1654 = vmatpush2.msra.mxu0 0.0
        %1655 = vmatprep.subr.mxu0 0.0
        %1656 = vmatpush2.msra.mxu0 0.0
        %1657 = vmatprep.subr.mxu0 0.0
        %1658 = vmatpush2.msra.mxu0 0.0
        %1659 = vmatprep.subr.mxu0 0.0
        %1660 = vmatpush2.msra.mxu0 0.0
        %1661 = vmatprep.subr.mxu0 0.0
        %1662 = vmatpush2.msra.mxu0 0.0
        %1663 = vmatprep.mubr.f32.mxu0 0.0
        %1664 = vmatmul.mubr.f32.gmra.mxu0 %v1594
        %v1665 = vpop.f32.mrf.mxu0
        %v1666 = vadd.f32 %v1586, %v1665
        %v1667 = vpop.f32.mrf.mxu0
        %v1668 = vadd.f32 %v1586, %v1667
        %1669 = vmatprep.mubr.f32.mxu0 0.0
        %1670 = vmatmul.mubr.f32.gmra.mxu0 %v1597
        %v1671 = vpop.f32.mrf.mxu0
        %v1672 = vadd.f32 %v1591, %v1671
        %v1673 = vpop.f32.mrf.mxu0
        %v1674 = vadd.f32 %v1591, %v1673
        %1675 = vdwg.mxu0
        %1676 = vst [vmem:[%s443] sm:$0xff] %v1666
        %1677 = vst [vmem:[%s443 + $0x8] sm:$0xff] %v1668
        %1678 = vst [vmem:[%s443 + $0x10] sm:$0xff] %v1672
        %1679 = vst [vmem:[%s443 + $0x18] sm:$0xff] %v1674
        %s1680 = sand.u32 %s290, 1
        %s1681 = scalar_lea.sflag [#allocation3], %s1680
        %s1682 = sand.u32 %s290, 1
        %s1683 = smul.addr %s1682, 32
        %s1684 = scalar_lea.vmem [#allocation2], %s1683
        %s1685 = sand.u32 %s318, 1
        %s1686 = scalar_lea.sflag [#allocation5], %s1685
        %s1687 = sand.u32 %s318, 1
        %s1688 = smul.addr %s1687, 32
        %s1689 = scalar_lea.vmem [#allocation4], %s1688
        // Predicated region
        $region65: #{tpu_custom_call.1} parent=63 // pred_check
          %p1690 = pneg %p300
        $region66: #{tpu_custom_call.1} parent=63 // pred_check_branch
          %1692 = sbr.rel (%p1690) target = $region68
        $region67: #{tpu_custom_call.1} parent=63 // pred_region
          %s1693 = smul.u32 2, %s35
          %s1695 = ssub.s32 512, 512
          %1696 = vsyncadd %s1681, %s1695
          %s1697 = smul.addr %s34, 8
          %s1698 = sadd.s32 %s1693, %s1697
          %s1699 = smul.addr %s1698, 128
          %s1700 = scalar_lea.hbm %s11, %s1699
          %s1701 = sshll.u32 %s1684, 4
          %s1702 = int_to_ptr.vmem [resolvable:$true] %s1701
          %1707 = dma.vmem_to_hbm [thread:$0]  %s1702, 512, %s1700, %s1681, 256, 512, 16
        $region68: #{tpu_custom_call.1} parent=63 // pred_fallthru
          _
        // Predicated region
        $region69: #{tpu_custom_call.1} parent=63 // pred_check
          %p1708 = pneg %p328
        $region70: #{tpu_custom_call.1} parent=63 // pred_check_branch
          %1710 = sbr.rel (%p1708) target = $region72
        $region71: #{tpu_custom_call.1} parent=63 // pred_region
          %s1711 = smul.u32 2, %s35
          %s1713 = ssub.s32 512, 512
          %1714 = vsyncadd %s1686, %s1713
          %s1715 = smul.addr %s34, 8
          %s1716 = sadd.s32 %s1711, %s1715
          %s1717 = smul.addr %s1716, 128
          %s1718 = scalar_lea.hbm %s12, %s1717
          %s1719 = sshll.u32 %s1689, 4
          %s1720 = int_to_ptr.vmem [resolvable:$true] %s1719
          %1725 = dma.vmem_to_hbm [thread:$0]  %s1720, 512, %s1718, %s1686, 256, 512, 16
        $region72: #{tpu_custom_call.1} parent=63 // pred_fallthru
          _
      $region64: #{tpu_custom_call.1} parent=5 // pred_fallthru
        _
      %p1726 = scmp.le.s32.totalorder 2, %s25
      // Predicated region
      $region73: #{tpu_custom_call.1} parent=5 // pred_check
        %p1727 = pneg %p1726
      $region74: #{tpu_custom_call.1} parent=5 // pred_check_branch
        %1729 = sbr.rel (%p1727) target = $region76
      $region75: #{tpu_custom_call.1} parent=5 // pred_region
        %s1730 = ssub.s32 %s25, 2
        // Predicated region
        $region77: #{tpu_custom_call.1} parent=75 // pred_check
          %p1731 = pneg %p306
        $region78: #{tpu_custom_call.1} parent=75 // pred_check_branch
          %1733 = sbr.rel (%p1731) target = $region80
        $region79: #{tpu_custom_call.1} parent=75 // pred_region
          %s1734 = sand.u32 %s291, 1
          %s1735 = scalar_lea.sflag [#allocation3], %s1734
          %s1736 = sand.u32 %s291, 1
          %s1737 = smul.addr %s1736, 32
          %s1738 = scalar_lea.vmem [#allocation2], %s1737
          %1739 = dma.done %s1735, 512
        $region80: #{tpu_custom_call.1} parent=75 // pred_fallthru
          _
        // Predicated region
        $region81: #{tpu_custom_call.1} parent=75 // pred_check
          %p1740 = pneg %p334
        $region82: #{tpu_custom_call.1} parent=75 // pred_check_branch
          %1742 = sbr.rel (%p1740) target = $region84
        $region83: #{tpu_custom_call.1} parent=75 // pred_region
          %s1743 = sand.u32 %s319, 1
          %s1744 = scalar_lea.sflag [#allocation5], %s1743
          %s1745 = sand.u32 %s319, 1
          %s1746 = smul.addr %s1745, 32
          %s1747 = scalar_lea.vmem [#allocation4], %s1746
          %1748 = dma.done %s1744, 512
        $region84: #{tpu_custom_call.1} parent=75 // pred_fallthru
          _
      $region76: #{tpu_custom_call.1} parent=5 // pred_fallthru
        _
    $region6: #{tpu_custom_call.1} parent=1 // loop_footer
      %s29 = sadd.s32 1, %s25
    $region7: #{tpu_custom_call.1} parent=1 // loop_footer_branch
      %24 = sbr.rel target = $region3
    $region8: #{tpu_custom_call.1} parent=1 // loop_exit
      _
    %1749 = vsyncpa [#allocation3], 1
    %s1750 = scalar_lea.sflag [#allocation3], 1
    %1751 = vsyncpa %s1750, 1
    %1752 = vsyncpa [#allocation5], 1
    %s1753 = scalar_lea.sflag [#allocation5], 1
    %1754 = vsyncpa %s1753, 1

</llo_original>
